<compile_context>
chip_gen: v5e
topology: v5e:2x2
jax: 0.10.0
libtpu: 0.0.40
codegen_flags: <defaults>
</compile_context>

<pallas_src>
import functools

import numpy as np
import jax
import jax.numpy as jnp
from jax.experimental import pallas as pl
from jax.experimental.pallas import tpu as pltpu


# ------------------------------- helpers ------------------------------------

def _round_up(x, m):
    return ((x + m - 1) // m) * m


def _lane_tile(r, max_tile=2048):
    """Whole axis if small / not 128-aligned, else a 128-multiple divisor."""
    if r <= max_tile or r % 128 != 0:
        return r
    t = max_tile - (max_tile % 128)
    while r % t != 0:
        t -= 128
    return t


def _interp_matrix(n_in, n_out):
    """1-D linear interpolation matrix, torch Upsample(align_corners=True)."""
    m = np.zeros((n_out, n_in), dtype=np.float32)
    if n_out == 1:
        m[0, 0] = 1.0
    elif n_in == 1:
        m[:, 0] = 1.0
    else:
        scale = (n_in - 1) / (n_out - 1)
        for i in range(n_out):
            src = i * scale
            i0 = min(int(np.floor(src)), n_in - 1)
            i1 = min(i0 + 1, n_in - 1)
            frac = src - i0
            m[i, i0] += 1.0 - frac
            m[i, i1] += frac
    return jnp.asarray(m)


# ------------------------------- kernels ------------------------------------

def _rows_matmul_kernel(m_ref, x_ref, o_ref):
    # One separable 1-D interpolation stage: o = M @ x (lane-dense output tile).
    o_ref[...] = jnp.dot(m_ref[...], x_ref[...],
                         preferred_element_type=jnp.float32)


def _conv_bn_stats_kernel(x_ref, w_ref, mask_ref, y_ref, sum_ref, sq_ref,
                          ssum_sc, ssq_sc, *, taps, e_pad):
    """3x3x3 conv as ONE K=27*Cin MXU matmul + one-pass BN statistics.

    x_ref:    (Cin_p, L_pad)   bf16  flattened zero-padded volume, one batch
    w_ref:    (Cout, 27*Cin_p) bf16
    mask_ref: (1, e_pad)       f32   1.0 on valid voxels of the extended grid
    y_ref:    (Cout, e_pad)    f32   pre-BN conv output (extended grid)
    sum_ref:  (Cout, 1)        f32   sum over valid voxels (all batches)
    sq_ref:   (Cout, 1)        f32   sum of squares over valid voxels
    """
    x = x_ref[...].astype(jnp.float32)
    # 27 shifted views of the same slab (contiguous lane-offset slices) -> one
    # (27*Cin, E) operand; no 27x HBM materialization.
    cols = [x[:, off:off + e_pad] for off in taps]
    im2col = jnp.concatenate(cols, axis=0).astype(jnp.bfloat16)
    acc = jnp.dot(w_ref[...], im2col, preferred_element_type=jnp.float32)
    y_ref[...] = acc

    @pl.when(pl.program_id(0) == 0)
    def _init():
        ssum_sc[...] = jnp.zeros_like(ssum_sc)
        ssq_sc[...] = jnp.zeros_like(ssq_sc)

    m = mask_ref[...]
    am = acc * m
    ssum_sc[...] += jnp.sum(am, axis=1, keepdims=True)
    ssq_sc[...] += jnp.sum(am * acc, axis=1, keepdims=True)

    @pl.when(pl.program_id(0) == pl.num_programs(0) - 1)
    def _finalize():
        sum_ref[...] = ssum_sc[...]
        sq_ref[...] = ssq_sc[...]


def _bn_silu_kernel(x_ref, scale_ref, shift_ref, o_ref):
    # y = x * scale + shift ; out = SiLU(y)   (all f32 epilogue)
    y = x_ref[...] * scale_ref[...] + shift_ref[...]
    o_ref[...] = y * jax.nn.sigmoid(y)


# ------------------------------- wrappers ------------------------------------

def _interp_stage(m, x2d):
    """o = m @ x2d with a lane-tiled Pallas matmul (m: (Ko,K), x2d: (K,R))."""
    ko, k = m.shape
    r = x2d.shape[1]
    t = _lane_tile(r)
    return pl.pallas_call(
        _rows_matmul_kernel,
        out_shape=jax.ShapeDtypeStruct((ko, r), jnp.float32),
        grid=(r // t,),
        in_specs=[pl.BlockSpec((ko, k), lambda j: (0, 0)),
                  pl.BlockSpec((k, t), lambda j: (0, j))],
        out_specs=pl.BlockSpec((ko, t), lambda j: (0, j)),
        compiler_params=pltpu.CompilerParams(
            dimension_semantics=("parallel",)),
    )(m, x2d)


def trilinear_upsample_x2(x):
    """(N,C,D,H,W) -> (N,C,2D,2H,2W); trilinear, align_corners=True (separable)."""
    n, c, d, h, w = x.shape
    do, ho, wo = 2 * d, 2 * h, 2 * w
    mw, mh, md = _interp_matrix(w, wo), _interp_matrix(h, ho), _interp_matrix(d, do)

    t = jnp.transpose(x, (4, 0, 1, 2, 3)).reshape(w, n * c * d * h)
    t = _interp_stage(mw, t)                                        # (Wo, N*C*D*H)
    t = t.reshape(wo, n, c, d, h).transpose(4, 1, 2, 3, 0).reshape(h, n * c * d * wo)
    t = _interp_stage(mh, t)                                        # (Ho, N*C*D*Wo)
    t = t.reshape(ho, n, c, d, wo).transpose(3, 1, 2, 0, 4).reshape(d, n * c * ho * wo)
    t = _interp_stage(md, t)                                        # (Do, N*C*Ho*Wo)
    return t.reshape(do, n, c, ho, wo).transpose(1, 2, 0, 3, 4)


def conv3x3x3_bn_silu(x, w, gamma, beta, eps=1e-5):
    """Conv3d(k=3, pad=1, bias=False) + BatchNorm3d (training stats) + SiLU.

    x: (N, Cin, D, H, W) f32;  w: PyTorch layout (Cout, Cin, 3, 3, 3) f32.
    Returns (N, Cout, D, H, W) f32.
    """
    n, cin, d, h, wsp = x.shape
    cout = w.shape[0]
    dp, hp, wp = d + 2, h + 2, wsp + 2
    cin_p = _round_up(cin, 8)                     # sublane-aligned channels

    # Extended output grid keeps the padded H/W columns (junk, masked/stripped)
    # so every 3x3x3 tap is a single contiguous lane-offset slice.
    e_len = d * hp * wp
    e_pad = _round_up(e_len, 128)                 # lane-dense pre-BN output
    max_off = 2 * hp * wp + 2 * wp + 2
    l_pad = _round_up(max_off + e_pad, 128)

    xp = jnp.pad(x, ((0, 0), (0, cin_p - cin), (1, 1), (1, 1), (1, 1)))
    xf = xp.reshape(n, cin_p, dp * hp * wp)
    xf = jnp.pad(xf, ((0, 0), (0, 0), (0, l_pad - dp * hp * wp)))
    xf = xf.astype(jnp.bfloat16)                  # bf16 HBM / MXU operand

    # Weights -> (Cout, 27*Cin_p), K ordered (kz, ky, kx, ci); bf16 MXU operand.
    wk = jnp.transpose(w, (0, 2, 3, 4, 1))
    wk = jnp.pad(wk, ((0, 0), (0, 0), (0, 0), (0, 0), (0, cin_p - cin)))
    wk = wk.reshape(cout, 27 * cin_p).astype(jnp.bfloat16)

    # Static validity mask of the extended output grid (trace-time constant).
    idx = np.arange(e_pad)
    dd, rem = idx // (hp * wp), idx % (hp * wp)
    hh, ww = rem // wp, rem % wp
    mask = jnp.asarray(((dd < d) & (hh < h) & (ww < wsp))
                       .astype(np.float32)[None, :])

    taps = tuple(kz * hp * wp + ky * wp + kx
                 for kz in range(3) for ky in range(3) for kx in range(3))

    y_ext, ssum, ssq = pl.pallas_call(
        functools.partial(_conv_bn_stats_kernel, taps=taps, e_pad=e_pad),
        grid=(n,),
        in_specs=[pl.BlockSpec((None, cin_p, l_pad), lambda b: (b, 0, 0)),
                  pl.BlockSpec((cout, 27 * cin_p), lambda b: (0, 0)),
                  pl.BlockSpec((1, e_pad), lambda b: (0, 0))],
        out_specs=[pl.BlockSpec((None, cout, e_pad), lambda b: (b, 0, 0)),
                   pl.BlockSpec((cout, 1), lambda b: (0, 0)),
                   pl.BlockSpec((cout, 1), lambda b: (0, 0))],
        out_shape=[jax.ShapeDtypeStruct((n, cout, e_pad), jnp.float32),
                   jax.ShapeDtypeStruct((cout, 1), jnp.float32),
                   jax.ShapeDtypeStruct((cout, 1), jnp.float32)],
        scratch_shapes=[pltpu.VMEM((cout, 1), jnp.float32),
                        pltpu.VMEM((cout, 1), jnp.float32)],
        compiler_params=pltpu.CompilerParams(
            dimension_semantics=("arbitrary",)),   # stats accumulate over batch
    )(xf, wk, mask)

    # Strip the junk columns of the extended grid -> (N, Cout, D*H*W).
    y = y_ext[:, :, :e_len].reshape(n, cout, d, hp, wp)[:, :, :, :h, :wsp]
    y = y.reshape(n, cout, d * h * wsp)

    # BatchNorm (training-mode, biased variance) folded to per-channel scale/shift.
    count = jnp.float32(n * d * h * wsp)
    mean = ssum[:, 0] / count
    var = jnp.maximum(ssq[:, 0] / count - mean * mean, 0.0)
    scale = gamma * jax.lax.rsqrt(var + eps)
    shift = beta - mean * scale
    scale = scale.reshape(cout, 1)
    shift = shift.reshape(cout, 1)

    s = d * h * wsp
    ts = _lane_tile(s)
    out = pl.pallas_call(
        _bn_silu_kernel,
        out_shape=jax.ShapeDtypeStruct((n, cout, s), jnp.float32),
        grid=(n, s // ts),
        in_specs=[pl.BlockSpec((None, cout, ts), lambda b, j: (b, 0, j)),
                  pl.BlockSpec((cout, 1), lambda b, j: (0, 0)),
                  pl.BlockSpec((cout, 1), lambda b, j: (0, 0))],
        out_specs=pl.BlockSpec((None, cout, ts), lambda b, j: (b, 0, j)),
        compiler_params=pltpu.CompilerParams(
            dimension_semantics=("parallel", "parallel")),
    )(y, scale, shift)
    return out.reshape(n, cout, d, h, wsp)


def up3d_forward(params, x1, x2):
    """Up3D.forward(x1, x2) with bilinear=True."""
    x1u = trilinear_upsample_x2(x1)
    dz = x2.shape[2] - x1u.shape[2]
    dy = x2.shape[3] - x1u.shape[3]
    dx = x2.shape[4] - x1u.shape[4]
    # F.pad semantics including negative padding (crop): lax.pad handles both.
    x1u = jax.lax.pad(x1u, jnp.array(0.0, x1u.dtype),
                      [(0, 0, 0), (0, 0, 0),
                       (dz // 2, dz - dz // 2, 0),
                       (dy // 2, dy - dy // 2, 0),
                       (dx // 2, dx - dx // 2, 0)])
    x = jnp.concatenate([x2, x1u], axis=1)        # torch.cat([x2, x1], dim=1)
    hmid = conv3x3x3_bn_silu(x, params['w1'], params['g1'], params['b1'])
    return conv3x3x3_bn_silu(hmid, params['w2'], params['g2'], params['b2'])


# --------------------------------- main --------------------------------------

if __name__ == "__main__":
    # Up3D(in_channels=8, out_channels=4, bilinear=True)
    in_channels, out_channels = 8, 4
    mid_channels = in_channels // 2
    N = 2
    d1 = h1 = w1 = 4                               # x1 spatial; x2 spatial is 2x

    key = jax.random.PRNGKey(0)
    k1, k2, k3, k4 = jax.random.split(key, 4)
    # skip connection: x1 and x2 each carry in_channels // 2 channels
    x1 = jax.random.normal(k1, (N, in_channels // 2, d1, h1, w1), jnp.float32)
    x2 = jax.random.normal(k2, (N, in_channels // 2, 2 * d1, 2 * h1, 2 * w1),
                           jnp.float32)

    params = {
        'w1': 0.2 * jax.random.normal(k3, (mid_channels, in_channels, 3, 3, 3),
                                      jnp.float32),
        'g1': jnp.ones((mid_channels,), jnp.float32),
        'b1': jnp.zeros((mid_channels,), jnp.float32),
        'w2': 0.2 * jax.random.normal(k4, (out_channels, mid_channels, 3, 3, 3),
                                      jnp.float32),
        'g2': jnp.ones((out_channels,), jnp.float32),
        'b2': jnp.zeros((out_channels,), jnp.float32),
    }

    out = jax.jit(up3d_forward)(params, x1, x2)
    out = jax.block_until_ready(out)
    assert out.shape == (N, out_channels, 2 * d1, 2 * h1, 2 * w1), out.shape
    assert bool(jnp.all(jnp.isfinite(out)))
    print("KERNEL_OK")
</pallas_src>

<mosaic_0001>
module attributes {stable_mosaic.version = 11 : i64} {
  func.func @_rows_matmul_kernel(%arg0: i32, %arg1: memref<8x4xf32, #tpu.memory_space<vmem>>, %arg2: memref<4x128xf32, #tpu.memory_space<vmem>>, %arg3: memref<8x128xf32, #tpu.memory_space<vmem>>) attributes {dimension_semantics = [#tpu.dimension_semantics<parallel>], iteration_bounds = array<i64: 1>, scalar_prefetch = 0 : i64, scratch_operands = 0 : i64, tpu.core_type = #tpu.core_type<tc>, window_params = [{pipeline_mode = #tpu.pipeline_mode<synchronous>, transform_indices = @transform_0, window_bounds = array<i64: 8, 4>}, {transform_indices = @transform_1, window_bounds = array<i64: 4, 128>}, {transform_indices = @transform_2, window_bounds = array<i64: 8, 128>}]} {
    %c0 = arith.constant 0 : index
    %c0_0 = arith.constant 0 : index
    %0 = vector.load %arg1[%c0, %c0_0] : memref<8x4xf32, #tpu.memory_space<vmem>>, vector<8x4xf32>
    %c0_1 = arith.constant 0 : index
    %c0_2 = arith.constant 0 : index
    %1 = vector.load %arg2[%c0_1, %c0_2] : memref<4x128xf32, #tpu.memory_space<vmem>>, vector<4x128xf32>
    %cst = arith.constant dense<0.000000e+00> : vector<8x128xf32>
    %2 = tpu.matmul %0, %1, %cst {dimension_numbers = #tpu.dot_dimension_numbers<[1], [0], [0], [1], [0, 0, 1, 1], [], []>} : vector<8x4xf32>, vector<4x128xf32>, vector<8x128xf32> -> vector<8x128xf32>
    %c0_3 = arith.constant 0 : index
    %c0_4 = arith.constant 0 : index
    %3 = vector.load %arg3[%c0_3, %c0_4] : memref<8x128xf32, #tpu.memory_space<vmem>>, vector<8x128xf32>
    tpu.vector_store %arg3[%c0_3, %c0_4], %2 {strides = array<i32>} : memref<8x128xf32, #tpu.memory_space<vmem>>, vector<8x128xf32>,
    return
  }
  func.func @transform_0(%arg0: i32) -> (i32, i32) {
    %c0_i32 = arith.constant 0 : i32
    %c0_i32_0 = arith.constant 0 : i32
    %c0_i32_1 = arith.constant 0 : i32
    return %c0_i32, %c0_i32_0 : i32, i32
  }
  func.func @transform_1(%arg0: i32) -> (i32, i32) {
    %c0_i32 = arith.constant 0 : i32
    %c0_i32_0 = arith.constant 0 : i32
    return %c0_i32, %arg0 : i32, i32
  }
  func.func @transform_2(%arg0: i32) -> (i32, i32) {
    %c0_i32 = arith.constant 0 : i32
    %c0_i32_0 = arith.constant 0 : i32
    return %c0_i32, %arg0 : i32, i32
  }
}

module attributes {stable_mosaic.version = 11 : i64} {
  func.func @_rows_matmul_kernel(%arg0: i32, %arg1: memref<8x4xf32, #tpu.memory_space<vmem>>, %arg2: memref<4x256xf32, #tpu.memory_space<vmem>>, %arg3: memref<8x256xf32, #tpu.memory_space<vmem>>) attributes {dimension_semantics = [#tpu.dimension_semantics<parallel>], iteration_bounds = array<i64: 1>, scalar_prefetch = 0 : i64, scratch_operands = 0 : i64, tpu.core_type = #tpu.core_type<tc>, window_params = [{pipeline_mode = #tpu.pipeline_mode<synchronous>, transform_indices = @transform_0, window_bounds = array<i64: 8, 4>}, {transform_indices = @transform_1, window_bounds = array<i64: 4, 256>}, {transform_indices = @transform_2, window_bounds = array<i64: 8, 256>}]} {
    %c0 = arith.constant 0 : index
    %c0_0 = arith.constant 0 : index
    %0 = vector.load %arg1[%c0, %c0_0] : memref<8x4xf32, #tpu.memory_space<vmem>>, vector<8x4xf32>
    %c0_1 = arith.constant 0 : index
    %c0_2 = arith.constant 0 : index
    %1 = vector.load %arg2[%c0_1, %c0_2] : memref<4x256xf32, #tpu.memory_space<vmem>>, vector<4x256xf32>
    %cst = arith.constant dense<0.000000e+00> : vector<8x256xf32>
    %2 = tpu.matmul %0, %1, %cst {dimension_numbers = #tpu.dot_dimension_numbers<[1], [0], [0], [1], [0, 0, 1, 1], [], []>} : vector<8x4xf32>, vector<4x256xf32>, vector<8x256xf32> -> vector<8x256xf32>
    %c0_3 = arith.constant 0 : index
    %c0_4 = arith.constant 0 : index
    %3 = vector.load %arg3[%c0_3, %c0_4] : memref<8x256xf32, #tpu.memory_space<vmem>>, vector<8x256xf32>
    tpu.vector_store %arg3[%c0_3, %c0_4], %2 {strides = array<i32>} : memref<8x256xf32, #tpu.memory_space<vmem>>, vector<8x256xf32>,
    return
  }
  func.func @transform_0(%arg0: i32) -> (i32, i32) {
    %c0_i32 = arith.constant 0 : i32
    %c0_i32_0 = arith.constant 0 : i32
    %c0_i32_1 = arith.constant 0 : i32
    return %c0_i32, %c0_i32_0 : i32, i32
  }
  func.func @transform_1(%arg0: i32) -> (i32, i32) {
    %c0_i32 = arith.constant 0 : i32
    %c0_i32_0 = arith.constant 0 : i32
    return %c0_i32, %arg0 : i32, i32
  }
  func.func @transform_2(%arg0: i32) -> (i32, i32) {
    %c0_i32 = arith.constant 0 : i32
    %c0_i32_0 = arith.constant 0 : i32
    return %c0_i32, %arg0 : i32, i32
  }
}

module attributes {stable_mosaic.version = 11 : i64} {
  func.func @_rows_matmul_kernel(%arg0: i32, %arg1: memref<8x4xf32, #tpu.memory_space<vmem>>, %arg2: memref<4x512xf32, #tpu.memory_space<vmem>>, %arg3: memref<8x512xf32, #tpu.memory_space<vmem>>) attributes {dimension_semantics = [#tpu.dimension_semantics<parallel>], iteration_bounds = array<i64: 1>, scalar_prefetch = 0 : i64, scratch_operands = 0 : i64, tpu.core_type = #tpu.core_type<tc>, window_params = [{pipeline_mode = #tpu.pipeline_mode<synchronous>, transform_indices = @transform_0, window_bounds = array<i64: 8, 4>}, {transform_indices = @transform_1, window_bounds = array<i64: 4, 512>}, {transform_indices = @transform_2, window_bounds = array<i64: 8, 512>}]} {
    %c0 = arith.constant 0 : index
    %c0_0 = arith.constant 0 : index
    %0 = vector.load %arg1[%c0, %c0_0] : memref<8x4xf32, #tpu.memory_space<vmem>>, vector<8x4xf32>
    %c0_1 = arith.constant 0 : index
    %c0_2 = arith.constant 0 : index
    %1 = vector.load %arg2[%c0_1, %c0_2] : memref<4x512xf32, #tpu.memory_space<vmem>>, vector<4x512xf32>
    %cst = arith.constant dense<0.000000e+00> : vector<8x512xf32>
    %2 = tpu.matmul %0, %1, %cst {dimension_numbers = #tpu.dot_dimension_numbers<[1], [0], [0], [1], [0, 0, 1, 1], [], []>} : vector<8x4xf32>, vector<4x512xf32>, vector<8x512xf32> -> vector<8x512xf32>
    %c0_3 = arith.constant 0 : index
    %c0_4 = arith.constant 0 : index
    %3 = vector.load %arg3[%c0_3, %c0_4] : memref<8x512xf32, #tpu.memory_space<vmem>>, vector<8x512xf32>
    tpu.vector_store %arg3[%c0_3, %c0_4], %2 {strides = array<i32>} : memref<8x512xf32, #tpu.memory_space<vmem>>, vector<8x512xf32>,
    return
  }
  func.func @transform_0(%arg0: i32) -> (i32, i32) {
    %c0_i32 = arith.constant 0 : i32
    %c0_i32_0 = arith.constant 0 : i32
    %c0_i32_1 = arith.constant 0 : i32
    return %c0_i32, %c0_i32_0 : i32, i32
  }
  func.func @transform_1(%arg0: i32) -> (i32, i32) {
    %c0_i32 = arith.constant 0 : i32
    %c0_i32_0 = arith.constant 0 : i32
    return %c0_i32, %arg0 : i32, i32
  }
  func.func @transform_2(%arg0: i32) -> (i32, i32) {
    %c0_i32 = arith.constant 0 : i32
    %c0_i32_0 = arith.constant 0 : i32
    return %c0_i32, %arg0 : i32, i32
  }
}

module attributes {stable_mosaic.version = 11 : i64} {
  func.func @_conv_bn_stats_kernel(%arg0: i32, %arg1: memref<1x8x1152xbf16, #tpu.memory_space<vmem>>, %arg2: memref<4x216xbf16, #tpu.memory_space<vmem>>, %arg3: memref<1x896xf32, #tpu.memory_space<vmem>>, %arg4: memref<1x4x896xf32, #tpu.memory_space<vmem>>, %arg5: memref<4x1xf32, #tpu.memory_space<vmem>>, %arg6: memref<4x1xf32, #tpu.memory_space<vmem>>, %arg7: memref<4x1xf32, #tpu.memory_space<vmem>>, %arg8: memref<4x1xf32, #tpu.memory_space<vmem>>) attributes {dimension_semantics = [#tpu.dimension_semantics<arbitrary>], iteration_bounds = array<i64: 2>, scalar_prefetch = 0 : i64, scratch_operands = 2 : i64, tpu.core_type = #tpu.core_type<tc>, window_params = [{transform_indices = @transform_0, window_bounds = array<i64: 1, 8, 1152>}, {pipeline_mode = #tpu.pipeline_mode<synchronous>, transform_indices = @transform_1, window_bounds = array<i64: 4, 216>}, {pipeline_mode = #tpu.pipeline_mode<synchronous>, transform_indices = @transform_2, window_bounds = array<i64: 1, 896>}, {transform_indices = @transform_3, window_bounds = array<i64: 1, 4, 896>}, {pipeline_mode = #tpu.pipeline_mode<synchronous>, transform_indices = @transform_4, window_bounds = array<i64: 4, 1>}, {pipeline_mode = #tpu.pipeline_mode<synchronous>, transform_indices = @transform_5, window_bounds = array<i64: 4, 1>}]} {
    %c0 = arith.constant 0 : index
    %c0_0 = arith.constant 0 : index
    %c0_1 = arith.constant 0 : index
    %0 = vector.load %arg1[%c0, %c0_0, %c0_1] : memref<1x8x1152xbf16, #tpu.memory_space<vmem>>, vector<1x8x1152xbf16>
    %1 = vector.shape_cast %0 : vector<1x8x1152xbf16> to vector<8x1152xbf16>
    %2 = arith.extf %1 : vector<8x1152xbf16> to vector<8x1152xf32>
    %3 = vector.extract_strided_slice %2 {offsets = [0, 0], sizes = [8, 896], strides = [1, 1]} : vector<8x1152xf32> to vector<8x896xf32>
    %4 = vector.extract_strided_slice %2 {offsets = [0, 1], sizes = [8, 896], strides = [1, 1]} : vector<8x1152xf32> to vector<8x896xf32>
    %5 = vector.extract_strided_slice %2 {offsets = [0, 2], sizes = [8, 896], strides = [1, 1]} : vector<8x1152xf32> to vector<8x896xf32>
    %6 = vector.extract_strided_slice %2 {offsets = [0, 10], sizes = [8, 896], strides = [1, 1]} : vector<8x1152xf32> to vector<8x896xf32>
    %7 = vector.extract_strided_slice %2 {offsets = [0, 11], sizes = [8, 896], strides = [1, 1]} : vector<8x1152xf32> to vector<8x896xf32>
    %8 = vector.extract_strided_slice %2 {offsets = [0, 12], sizes = [8, 896], strides = [1, 1]} : vector<8x1152xf32> to vector<8x896xf32>
    %9 = vector.extract_strided_slice %2 {offsets = [0, 20], sizes = [8, 896], strides = [1, 1]} : vector<8x1152xf32> to vector<8x896xf32>
    %10 = vector.extract_strided_slice %2 {offsets = [0, 21], sizes = [8, 896], strides = [1, 1]} : vector<8x1152xf32> to vector<8x896xf32>
    %11 = vector.extract_strided_slice %2 {offsets = [0, 22], sizes = [8, 896], strides = [1, 1]} : vector<8x1152xf32> to vector<8x896xf32>
    %12 = vector.extract_strided_slice %2 {offsets = [0, 100], sizes = [8, 896], strides = [1, 1]} : vector<8x1152xf32> to vector<8x896xf32>
    %13 = vector.extract_strided_slice %2 {offsets = [0, 101], sizes = [8, 896], strides = [1, 1]} : vector<8x1152xf32> to vector<8x896xf32>
    %14 = vector.extract_strided_slice %2 {offsets = [0, 102], sizes = [8, 896], strides = [1, 1]} : vector<8x1152xf32> to vector<8x896xf32>
    %15 = vector.extract_strided_slice %2 {offsets = [0, 110], sizes = [8, 896], strides = [1, 1]} : vector<8x1152xf32> to vector<8x896xf32>
    %16 = vector.extract_strided_slice %2 {offsets = [0, 111], sizes = [8, 896], strides = [1, 1]} : vector<8x1152xf32> to vector<8x896xf32>
    %17 = vector.extract_strided_slice %2 {offsets = [0, 112], sizes = [8, 896], strides = [1, 1]} : vector<8x1152xf32> to vector<8x896xf32>
    %18 = vector.extract_strided_slice %2 {offsets = [0, 120], sizes = [8, 896], strides = [1, 1]} : vector<8x1152xf32> to vector<8x896xf32>
    %19 = vector.extract_strided_slice %2 {offsets = [0, 121], sizes = [8, 896], strides = [1, 1]} : vector<8x1152xf32> to vector<8x896xf32>
    %20 = vector.extract_strided_slice %2 {offsets = [0, 122], sizes = [8, 896], strides = [1, 1]} : vector<8x1152xf32> to vector<8x896xf32>
    %21 = vector.extract_strided_slice %2 {offsets = [0, 200], sizes = [8, 896], strides = [1, 1]} : vector<8x1152xf32> to vector<8x896xf32>
    %22 = vector.extract_strided_slice %2 {offsets = [0, 201], sizes = [8, 896], strides = [1, 1]} : vector<8x1152xf32> to vector<8x896xf32>
    %23 = vector.extract_strided_slice %2 {offsets = [0, 202], sizes = [8, 896], strides = [1, 1]} : vector<8x1152xf32> to vector<8x896xf32>
    %24 = vector.extract_strided_slice %2 {offsets = [0, 210], sizes = [8, 896], strides = [1, 1]} : vector<8x1152xf32> to vector<8x896xf32>
    %25 = vector.extract_strided_slice %2 {offsets = [0, 211], sizes = [8, 896], strides = [1, 1]} : vector<8x1152xf32> to vector<8x896xf32>
    %26 = vector.extract_strided_slice %2 {offsets = [0, 212], sizes = [8, 896], strides = [1, 1]} : vector<8x1152xf32> to vector<8x896xf32>
    %27 = vector.extract_strided_slice %2 {offsets = [0, 220], sizes = [8, 896], strides = [1, 1]} : vector<8x1152xf32> to vector<8x896xf32>
    %28 = vector.extract_strided_slice %2 {offsets = [0, 221], sizes = [8, 896], strides = [1, 1]} : vector<8x1152xf32> to vector<8x896xf32>
    %29 = vector.extract_strided_slice %2 {offsets = [0, 222], sizes = [8, 896], strides = [1, 1]} : vector<8x1152xf32> to vector<8x896xf32>
    %30 = tpu.concatenate %3, %4, %5, %6, %7, %8, %9, %10, %11, %12, %13, %14, %15, %16, %17, %18 in 0 : vector<8x896xf32>, vector<8x896xf32>, vector<8x896xf32>, vector<8x896xf32>, vector<8x896xf32>, vector<8x896xf32>, vector<8x896xf32>, vector<8x896xf32>, vector<8x896xf32>, vector<8x896xf32>, vector<8x896xf32>, vector<8x896xf32>, vector<8x896xf32>, vector<8x896xf32>, vector<8x896xf32>, vector<8x896xf32> -> vector<128x896xf32>
    %31 = tpu.concatenate %19, %20, %21, %22, %23, %24, %25, %26, %27, %28, %29 in 0 : vector<8x896xf32>, vector<8x896xf32>, vector<8x896xf32>, vector<8x896xf32>, vector<8x896xf32>, vector<8x896xf32>, vector<8x896xf32>, vector<8x896xf32>, vector<8x896xf32>, vector<8x896xf32>, vector<8x896xf32> -> vector<88x896xf32>
    %32 = tpu.concatenate %30, %31 in 0 : vector<128x896xf32>, vector<88x896xf32> -> vector<216x896xf32>
    %33 = arith.truncf %32 : vector<216x896xf32> to vector<216x896xbf16>
    %c0_2 = arith.constant 0 : index
    %c0_3 = arith.constant 0 : index
    %34 = vector.load %arg2[%c0_2, %c0_3] : memref<4x216xbf16, #tpu.memory_space<vmem>>, vector<4x216xbf16>
    %cst = arith.constant dense<0.000000e+00> : vector<4x896xf32>
    %35 = tpu.matmul %34, %33, %cst {dimension_numbers = #tpu.dot_dimension_numbers<[1], [0], [0], [1], [0, 0, 1, 1], [], []>} : vector<4x216xbf16>, vector<216x896xbf16>, vector<4x896xf32> -> vector<4x896xf32>
    %c0_4 = arith.constant 0 : index
    %c0_5 = arith.constant 0 : index
    %c0_6 = arith.constant 0 : index
    %36 = vector.load %arg4[%c0_4, %c0_5, %c0_6] : memref<1x4x896xf32, #tpu.memory_space<vmem>>, vector<1x4x896xf32>
    %37 = vector.shape_cast %36 : vector<1x4x896xf32> to vector<4x896xf32>
    %38 = vector.shape_cast %35 : vector<4x896xf32> to vector<1x4x896xf32>
    tpu.vector_store %arg4[%c0_4, %c0_5, %c0_6], %38 {strides = array<i32>} : memref<1x4x896xf32, #tpu.memory_space<vmem>>, vector<1x4x896xf32>,
    %c0_i32 = arith.constant 0 : i32
    %39 = arith.cmpi eq, %arg0, %c0_i32 : i32
    %40 = arith.extui %39 : i1 to i32
    %c0_i32_7 = arith.constant 0 : i32
    %41 = arith.cmpi ne, %40, %c0_i32_7 : i32
    scf.if %41 {
      %cst_21 = arith.constant 0.000000e+00 : f32
      %59 = vector.broadcast %cst_21 : f32 to vector<4x1xf32>
      %c0_22 = arith.constant 0 : index
      %c0_23 = arith.constant 0 : index
      %60 = vector.load %arg7[%c0_22, %c0_23] : memref<4x1xf32, #tpu.memory_space<vmem>>, vector<4x1xf32>
      tpu.vector_store %arg7[%c0_22, %c0_23], %59 {strides = array<i32>} : memref<4x1xf32, #tpu.memory_space<vmem>>, vector<4x1xf32>,
      %cst_24 = arith.constant 0.000000e+00 : f32
      %61 = vector.broadcast %cst_24 : f32 to vector<4x1xf32>
      %c0_25 = arith.constant 0 : index
      %c0_26 = arith.constant 0 : index
      %62 = vector.load %arg8[%c0_25, %c0_26] : memref<4x1xf32, #tpu.memory_space<vmem>>, vector<4x1xf32>
      tpu.vector_store %arg8[%c0_25, %c0_26], %61 {strides = array<i32>} : memref<4x1xf32, #tpu.memory_space<vmem>>, vector<4x1xf32>,
    } else {
    }
    %c0_8 = arith.constant 0 : index
    %c0_9 = arith.constant 0 : index
    %42 = vector.load %arg3[%c0_8, %c0_9] : memref<1x896xf32, #tpu.memory_space<vmem>>, vector<1x896xf32>
    %43 = vector.broadcast %42 : vector<1x896xf32> to vector<4x896xf32>
    %44 = arith.mulf %35, %43 : vector<4x896xf32>
    %c0_10 = arith.constant 0 : index
    %c0_11 = arith.constant 0 : index
    %45 = vector.load %arg7[%c0_10, %c0_11] : memref<4x1xf32, #tpu.memory_space<vmem>>, vector<4x1xf32>
    %cst_12 = arith.constant dense<0.000000e+00> : vector<4xf32>
    %46 = vector.multi_reduction <add>, %44, %cst_12 [1] : vector<4x896xf32> to vector<4xf32>
    %47 = vector.shape_cast %46 : vector<4xf32> to vector<4x1xf32>
    %48 = arith.addf %45, %47 : vector<4x1xf32>
    %c0_13 = arith.constant 0 : index
    %c0_14 = arith.constant 0 : index
    %49 = vector.load %arg7[%c0_13, %c0_14] : memref<4x1xf32, #tpu.memory_space<vmem>>, vector<4x1xf32>
    tpu.vector_store %arg7[%c0_13, %c0_14], %48 {strides = array<i32>} : memref<4x1xf32, #tpu.memory_space<vmem>>, vector<4x1xf32>,
    %c0_15 = arith.constant 0 : index
    %c0_16 = arith.constant 0 : index
    %50 = vector.load %arg8[%c0_15, %c0_16] : memref<4x1xf32, #tpu.memory_space<vmem>>, vector<4x1xf32>
    %51 = arith.mulf %44, %35 : vector<4x896xf32>
    %cst_17 = arith.constant dense<0.000000e+00> : vector<4xf32>
    %52 = vector.multi_reduction <add>, %51, %cst_17 [1] : vector<4x896xf32> to vector<4xf32>
    %53 = vector.shape_cast %52 : vector<4xf32> to vector<4x1xf32>
    %54 = arith.addf %50, %53 : vector<4x1xf32>
    %c0_18 = arith.constant 0 : index
    %c0_19 = arith.constant 0 : index
    %55 = vector.load %arg8[%c0_18, %c0_19] : memref<4x1xf32, #tpu.memory_space<vmem>>, vector<4x1xf32>
    tpu.vector_store %arg8[%c0_18, %c0_19], %54 {strides = array<i32>} : memref<4x1xf32, #tpu.memory_space<vmem>>, vector<4x1xf32>,
    %c1_i32 = arith.constant 1 : i32
    %56 = arith.cmpi eq, %arg0, %c1_i32 : i32
    %57 = arith.extui %56 : i1 to i32
    %c0_i32_20 = arith.constant 0 : i32
    %58 = arith.cmpi ne, %57, %c0_i32_20 : i32
    scf.if %58 {
      %c0_21 = arith.constant 0 : index
      %c0_22 = arith.constant 0 : index
      %59 = vector.load %arg7[%c0_21, %c0_22] : memref<4x1xf32, #tpu.memory_space<vmem>>, vector<4x1xf32>
      %c0_23 = arith.constant 0 : index
      %c0_24 = arith.constant 0 : index
      %60 = vector.load %arg5[%c0_23, %c0_24] : memref<4x1xf32, #tpu.memory_space<vmem>>, vector<4x1xf32>
      tpu.vector_store %arg5[%c0_23, %c0_24], %59 {strides = array<i32>} : memref<4x1xf32, #tpu.memory_space<vmem>>, vector<4x1xf32>,
      %c0_25 = arith.constant 0 : index
      %c0_26 = arith.constant 0 : index
      %61 = vector.load %arg8[%c0_25, %c0_26] : memref<4x1xf32, #tpu.memory_space<vmem>>, vector<4x1xf32>
      %c0_27 = arith.constant 0 : index
      %c0_28 = arith.constant 0 : index
      %62 = vector.load %arg6[%c0_27, %c0_28] : memref<4x1xf32, #tpu.memory_space<vmem>>, vector<4x1xf32>
      tpu.vector_store %arg6[%c0_27, %c0_28], %61 {strides = array<i32>} : memref<4x1xf32, #tpu.memory_space<vmem>>, vector<4x1xf32>,
    } else {
    }
    return
  }
  func.func @transform_0(%arg0: i32) -> (i32, i32, i32) {
    %c0_i32 = arith.constant 0 : i32
    %c0_i32_0 = arith.constant 0 : i32
    %c0_i32_1 = arith.constant 0 : i32
    return %arg0, %c0_i32, %c0_i32_0 : i32, i32, i32
  }
  func.func @transform_1(%arg0: i32) -> (i32, i32) {
    %c0_i32 = arith.constant 0 : i32
    %c0_i32_0 = arith.constant 0 : i32
    %c0_i32_1 = arith.constant 0 : i32
    return %c0_i32, %c0_i32_0 : i32, i32
  }
  func.func @transform_2(%arg0: i32) -> (i32, i32) {
    %c0_i32 = arith.constant 0 : i32
    %c0_i32_0 = arith.constant 0 : i32
    %c0_i32_1 = arith.constant 0 : i32
    return %c0_i32, %c0_i32_0 : i32, i32
  }
  func.func @transform_3(%arg0: i32) -> (i32, i32, i32) {
    %c0_i32 = arith.constant 0 : i32
    %c0_i32_0 = arith.constant 0 : i32
    %c0_i32_1 = arith.constant 0 : i32
    return %arg0, %c0_i32, %c0_i32_0 : i32, i32, i32
  }
  func.func @transform_4(%arg0: i32) -> (i32, i32) {
    %c0_i32 = arith.constant 0 : i32
    %c0_i32_0 = arith.constant 0 : i32
    %c0_i32_1 = arith.constant 0 : i32
    return %c0_i32, %c0_i32_0 : i32, i32
  }
  func.func @transform_5(%arg0: i32) -> (i32, i32) {
    %c0_i32 = arith.constant 0 : i32
    %c0_i32_0 = arith.constant 0 : i32
    %c0_i32_1 = arith.constant 0 : i32
    return %c0_i32, %c0_i32_0 : i32, i32
  }
}

module attributes {stable_mosaic.version = 11 : i64} {
  func.func @_bn_silu_kernel(%arg0: i32, %arg1: i32, %arg2: memref<1x4x512xf32, #tpu.memory_space<vmem>>, %arg3: memref<4x1xf32, #tpu.memory_space<vmem>>, %arg4: memref<4x1xf32, #tpu.memory_space<vmem>>, %arg5: memref<1x4x512xf32, #tpu.memory_space<vmem>>) attributes {dimension_semantics = [#tpu.dimension_semantics<parallel>, #tpu.dimension_semantics<parallel>], iteration_bounds = array<i64: 2, 1>, scalar_prefetch = 0 : i64, scratch_operands = 0 : i64, tpu.core_type = #tpu.core_type<tc>, window_params = [{transform_indices = @transform_0, window_bounds = array<i64: 1, 4, 512>}, {pipeline_mode = #tpu.pipeline_mode<synchronous>, transform_indices = @transform_1, window_bounds = array<i64: 4, 1>}, {pipeline_mode = #tpu.pipeline_mode<synchronous>, transform_indices = @transform_2, window_bounds = array<i64: 4, 1>}, {transform_indices = @transform_3, window_bounds = array<i64: 1, 4, 512>}]} {
    %c0 = arith.constant 0 : index
    %c0_0 = arith.constant 0 : index
    %c0_1 = arith.constant 0 : index
    %0 = vector.load %arg2[%c0, %c0_0, %c0_1] : memref<1x4x512xf32, #tpu.memory_space<vmem>>, vector<1x4x512xf32>
    %1 = vector.shape_cast %0 : vector<1x4x512xf32> to vector<4x512xf32>
    %c0_2 = arith.constant 0 : index
    %c0_3 = arith.constant 0 : index
    %2 = vector.load %arg3[%c0_2, %c0_3] : memref<4x1xf32, #tpu.memory_space<vmem>>, vector<4x1xf32>
    %3 = vector.broadcast %2 : vector<4x1xf32> to vector<4x512xf32>
    %4 = arith.mulf %1, %3 : vector<4x512xf32>
    %c0_4 = arith.constant 0 : index
    %c0_5 = arith.constant 0 : index
    %5 = vector.load %arg4[%c0_4, %c0_5] : memref<4x1xf32, #tpu.memory_space<vmem>>, vector<4x1xf32>
    %6 = vector.broadcast %5 : vector<4x1xf32> to vector<4x512xf32>
    %7 = arith.addf %4, %6 : vector<4x512xf32>
    %8 = arith.negf %7 : vector<4x512xf32>
    %9 = math.exp %8 : vector<4x512xf32>
    %cst = arith.constant 1.000000e+00 : f32
    %10 = vector.broadcast %cst : f32 to vector<4x512xf32>
    %11 = arith.addf %10, %9 : vector<4x512xf32>
    %12 = arith.divf %10, %11 : vector<4x512xf32>
    %13 = arith.mulf %7, %12 : vector<4x512xf32>
    %c0_6 = arith.constant 0 : index
    %c0_7 = arith.constant 0 : index
    %c0_8 = arith.constant 0 : index
    %14 = vector.load %arg5[%c0_6, %c0_7, %c0_8] : memref<1x4x512xf32, #tpu.memory_space<vmem>>, vector<1x4x512xf32>
    %15 = vector.shape_cast %14 : vector<1x4x512xf32> to vector<4x512xf32>
    %16 = vector.shape_cast %13 : vector<4x512xf32> to vector<1x4x512xf32>
    tpu.vector_store %arg5[%c0_6, %c0_7, %c0_8], %16 {strides = array<i32>} : memref<1x4x512xf32, #tpu.memory_space<vmem>>, vector<1x4x512xf32>,
    return
  }
  func.func @transform_0(%arg0: i32, %arg1: i32) -> (i32, i32, i32) {
    %c0_i32 = arith.constant 0 : i32
    %c0_i32_0 = arith.constant 0 : i32
    return %arg0, %c0_i32, %arg1 : i32, i32, i32
  }
  func.func @transform_1(%arg0: i32, %arg1: i32) -> (i32, i32) {
    %c0_i32 = arith.constant 0 : i32
    %c0_i32_0 = arith.constant 0 : i32
    %c0_i32_1 = arith.constant 0 : i32
    return %c0_i32, %c0_i32_0 : i32, i32
  }
  func.func @transform_2(%arg0: i32, %arg1: i32) -> (i32, i32) {
    %c0_i32 = arith.constant 0 : i32
    %c0_i32_0 = arith.constant 0 : i32
    %c0_i32_1 = arith.constant 0 : i32
    return %c0_i32, %c0_i32_0 : i32, i32
  }
  func.func @transform_3(%arg0: i32, %arg1: i32) -> (i32, i32, i32) {
    %c0_i32 = arith.constant 0 : i32
    %c0_i32_0 = arith.constant 0 : i32
    return %arg0, %c0_i32, %arg1 : i32, i32, i32
  }
}

</mosaic_0001>

<llo_original>
// kernel: up3d_forward.7
$region0: #{up3d_forward.7}
  #allocation0 [shape = 'u32[]', space=smem, size = 0x4, offset = 0x4, fixed_abs, tag = 'smem constant byte address 0x4 - core index']
  #allocation1 [shape = 'u32[72,128]{1,0:T(1,128)}', space=vmem, size = 0x9000, scoped, tag = 'internal scratch']
  %s0 = inlined_call_operand.hbm [shape: f32[8,4], index: 0, kind: input, shape index: {}]
  %s1 = inlined_call_operand.vmem [shape: f32[4,128], index: 1, kind: input, shape index: {}]
  %s2 = inlined_call_operand.vmem [shape: f32[8,128], index: 2, kind: output, shape index: {}]
  %s3 = sld [smem:[#allocation0]]
  $region22: #{up3d_forward.7} parent=0
    _
  %s5 = ssub.s32 1, %s3
  %s6 = scalar_select 0, %s5, %s3
  $region1: #{up3d_forward.7} parent=0
    #allocation2 [shape = 'u8[4096]{0}', space=vmem, size = 0x1000, scoped, tag = 'input window, operand 0, single buffered']
    #allocation3 [shape = 's32[1]{0}', space=sflag, size = 0x4, scoped, tag = 'scoped memory for up3d_forward.7']
    %7 = vsyncpa [#allocation3], 0
    // Predicated region
    $region2: #{up3d_forward.7} parent=1 // pred_check
      _
    $region3: #{up3d_forward.7} parent=1 // pred_check_branch
      %9 = sbr.rel (0) target = $region5
    $region4: #{up3d_forward.7} parent=1 // pred_region
      %11 = vsyncadd [#allocation3], 0
      %s13 = sshll.u32 %s0, 4
      %s14 = int_to_ptr.hbm [resolvable:$true] %s13
      %s15 = sshll.u32 [#allocation2], 4
      %s16 = int_to_ptr.vmem [resolvable:$true] %s15
      %18 = dma.hbm_to_vmem [thread:$0]  %s14, 128, %s16, [#allocation3]
    $region5: #{up3d_forward.7} parent=1 // pred_fallthru
      _
    // Predicated region
    $region6: #{up3d_forward.7} parent=1 // pred_check
      _
    $region7: #{up3d_forward.7} parent=1 // pred_check_branch
      %20 = sbr.rel (0) target = $region9
    $region8: #{up3d_forward.7} parent=1 // pred_region
      _
    $region9: #{up3d_forward.7} parent=1 // pred_fallthru
      _
    // Predicated region
    $region10: #{up3d_forward.7} parent=1 // pred_check
      _
    $region11: #{up3d_forward.7} parent=1 // pred_check_branch
      %22 = sbr.rel (0) target = $region13
    $region12: #{up3d_forward.7} parent=1 // pred_region
      %24 = dma.done [#allocation3], 128
    $region13: #{up3d_forward.7} parent=1 // pred_fallthru
      _
    %v25 = vld [vmem:[#allocation2] sm:$0xff]
    %v26 = vld [vmem:[%s1] sm:$0xf]
    %vm27 = vcmask 31744
    %v29 = vsel %vm27, %v25, 0
    %vm31 = vcmask 1043456
    %v33 = vsel %vm31, %v26, 0
    %35 = vmatpush.msra.mxu0 0.0
    %36 = vmatpush.msra.mxu0 0.0
    %37 = vmatpush.msra.mxu0 0.0
    %38 = vmatpush.msra.mxu0 0.0
    %39 = vmatpush.msra.mxu0 0.0
    %40 = vmatpush.msra.mxu0 0.0
    %41 = vmatpush.msra.mxu0 0.0
    %42 = vmatpush.msra.mxu0 0.0
    %43 = vmatpush.msra.mxu0 0.0
    %44 = vmatpush.msra.mxu0 0.0
    %45 = vmatpush.msra.mxu0 0.0
    %46 = vmatpush.msra.mxu0 0.0
    %47 = vmatpush.msra.mxu0 0.0
    %48 = vmatpush.msra.mxu0 0.0
    %49 = vmatpush.msra.mxu0 0.0
    %50 = vmatpush.msra.mxu0 %v33
    %51 = vmatmul.f32.gmra.mxu0 %v29
    %v52 = vpop.f32.mrf.mxu0
    %v53 = vadd.f32 0.0, %v52
    %54 = vdwg.mxu0
    %55 = vst [vmem:[%s2] sm:$0xff] %v53
    // Predicated region
    $region14: #{up3d_forward.7} parent=1 // pred_check
      _
    $region15: #{up3d_forward.7} parent=1 // pred_check_branch
      %57 = sbr.rel (0) target = $region17
    $region16: #{up3d_forward.7} parent=1 // pred_region
      _
    $region17: #{up3d_forward.7} parent=1 // pred_fallthru
      _
    // Predicated region
    $region18: #{up3d_forward.7} parent=1 // pred_check
      _
    $region19: #{up3d_forward.7} parent=1 // pred_check_branch
      %59 = sbr.rel (0) target = $region21
    $region20: #{up3d_forward.7} parent=1 // pred_region
      _
    $region21: #{up3d_forward.7} parent=1 // pred_fallthru
      _
    %60 = vsyncpa [#allocation3], 1

// kernel: up3d_forward.8
$region0: #{up3d_forward.8}
  #allocation0 [shape = 'u32[]', space=smem, size = 0x4, offset = 0x4, fixed_abs, tag = 'smem constant byte address 0x4 - core index']
  #allocation1 [shape = 'u32[72,128]{1,0:T(1,128)}', space=vmem, size = 0x9000, scoped, tag = 'internal scratch']
  %s0 = inlined_call_operand.hbm [shape: f32[8,4], index: 0, kind: input, shape index: {}]
  %s1 = inlined_call_operand.vmem [shape: f32[4,256], index: 1, kind: input, shape index: {}]
  %s2 = inlined_call_operand.vmem [shape: f32[8,256], index: 2, kind: output, shape index: {}]
  %s3 = sld [smem:[#allocation0]]
  $region22: #{up3d_forward.8} parent=0
    _
  %s5 = ssub.s32 1, %s3
  %s6 = scalar_select 0, %s5, %s3
  $region1: #{up3d_forward.8} parent=0
    #allocation2 [shape = 'u8[4096]{0}', space=vmem, size = 0x1000, scoped, tag = 'input window, operand 0, single buffered']
    #allocation3 [shape = 's32[1]{0}', space=sflag, size = 0x4, scoped, tag = 'scoped memory for up3d_forward.8']
    %7 = vsyncpa [#allocation3], 0
    // Predicated region
    $region2: #{up3d_forward.8} parent=1 // pred_check
      _
    $region3: #{up3d_forward.8} parent=1 // pred_check_branch
      %9 = sbr.rel (0) target = $region5
    $region4: #{up3d_forward.8} parent=1 // pred_region
      %11 = vsyncadd [#allocation3], 0
      %s13 = sshll.u32 %s0, 4
      %s14 = int_to_ptr.hbm [resolvable:$true] %s13
      %s15 = sshll.u32 [#allocation2], 4
      %s16 = int_to_ptr.vmem [resolvable:$true] %s15
      %18 = dma.hbm_to_vmem [thread:$0]  %s14, 128, %s16, [#allocation3]
    $region5: #{up3d_forward.8} parent=1 // pred_fallthru
      _
    // Predicated region
    $region6: #{up3d_forward.8} parent=1 // pred_check
      _
    $region7: #{up3d_forward.8} parent=1 // pred_check_branch
      %20 = sbr.rel (0) target = $region9
    $region8: #{up3d_forward.8} parent=1 // pred_region
      _
    $region9: #{up3d_forward.8} parent=1 // pred_fallthru
      _
    // Predicated region
    $region10: #{up3d_forward.8} parent=1 // pred_check
      _
    $region11: #{up3d_forward.8} parent=1 // pred_check_branch
      %22 = sbr.rel (0) target = $region13
    $region12: #{up3d_forward.8} parent=1 // pred_region
      %24 = dma.done [#allocation3], 128
    $region13: #{up3d_forward.8} parent=1 // pred_fallthru
      _
    %v25 = vld [vmem:[#allocation2] sm:$0xff]
    %v26 = vld [vmem:[%s1] sm:$0xff]
    %28 = vst [vmem:[#allocation1] ss:$2 sm:$0xff] %v26
    %v29 = vld.sshfl [vmem:[#allocation1] sm:$0xff pattern:$0x75316420]
    %v30 = vld.sshfl [vmem:[#allocation1 + $0x8] sm:$0xff pattern:$0x75316420]
    %vm31 = vcmask 31744
    %v33 = vsel %vm31, %v25, 0
    %vm35 = vcmask 1043456
    %v36 = vsel %vm35, %v29, 0
    %v38 = vsel %vm35, %v30, 0
    %40 = vmatpush.msra.mxu0 0.0
    %41 = vmatpush.msra.mxu0 0.0
    %42 = vmatpush.msra.mxu0 0.0
    %43 = vmatpush.msra.mxu0 0.0
    %44 = vmatpush.msra.mxu0 0.0
    %45 = vmatpush.msra.mxu0 0.0
    %46 = vmatpush.msra.mxu0 0.0
    %47 = vmatpush.msra.mxu0 0.0
    %48 = vmatpush.msra.mxu0 0.0
    %49 = vmatpush.msra.mxu0 0.0
    %50 = vmatpush.msra.mxu0 0.0
    %51 = vmatpush.msra.mxu0 0.0
    %52 = vmatpush.msra.mxu0 0.0
    %53 = vmatpush.msra.mxu0 0.0
    %54 = vmatpush.msra.mxu0 0.0
    %55 = vmatpush.msra.mxu0 %v36
    %56 = vmatmul.f32.gmra.mxu0 %v33
    %v57 = vpop.f32.mrf.mxu0
    %v58 = vadd.f32 0.0, %v57
    %59 = vdwg.mxu0
    %60 = vmatpush.msra.mxu0 0.0
    %61 = vmatpush.msra.mxu0 0.0
    %62 = vmatpush.msra.mxu0 0.0
    %63 = vmatpush.msra.mxu0 0.0
    %64 = vmatpush.msra.mxu0 0.0
    %65 = vmatpush.msra.mxu0 0.0
    %66 = vmatpush.msra.mxu0 0.0
    %67 = vmatpush.msra.mxu0 0.0
    %68 = vmatpush.msra.mxu0 0.0
    %69 = vmatpush.msra.mxu0 0.0
    %70 = vmatpush.msra.mxu0 0.0
    %71 = vmatpush.msra.mxu0 0.0
    %72 = vmatpush.msra.mxu0 0.0
    %73 = vmatpush.msra.mxu0 0.0
    %74 = vmatpush.msra.mxu0 0.0
    %75 = vmatpush.msra.mxu0 %v38
    %76 = vmatmul.f32.gmra.mxu0 %v33
    %v77 = vpop.f32.mrf.mxu0
    %v78 = vadd.f32 0.0, %v77
    %79 = vdwg.mxu0
    %80 = vst [vmem:[%s2] sm:$0xff] %v58
    %81 = vst [vmem:[%s2 + $0x8] sm:$0xff] %v78
    // Predicated region
    $region14: #{up3d_forward.8} parent=1 // pred_check
      _
    $region15: #{up3d_forward.8} parent=1 // pred_check_branch
      %83 = sbr.rel (0) target = $region17
    $region16: #{up3d_forward.8} parent=1 // pred_region
      _
    $region17: #{up3d_forward.8} parent=1 // pred_fallthru
      _
    // Predicated region
    $region18: #{up3d_forward.8} parent=1 // pred_check
      _
    $region19: #{up3d_forward.8} parent=1 // pred_check_branch
      %85 = sbr.rel (0) target = $region21
    $region20: #{up3d_forward.8} parent=1 // pred_region
      _
    $region21: #{up3d_forward.8} parent=1 // pred_fallthru
      _
    %86 = vsyncpa [#allocation3], 1

// kernel: up3d_forward.9
$region0: #{up3d_forward.9}
  #allocation0 [shape = 'u32[]', space=smem, size = 0x4, offset = 0x4, fixed_abs, tag = 'smem constant byte address 0x4 - core index']
  #allocation1 [shape = 'u32[72,128]{1,0:T(1,128)}', space=vmem, size = 0x9000, scoped, tag = 'internal scratch']
  %s0 = inlined_call_operand.vmem [shape: f32[8,4], index: 0, kind: input, shape index: {}]
  %s1 = inlined_call_operand.vmem [shape: f32[4,512], index: 1, kind: input, shape index: {}]
  %s2 = inlined_call_operand.vmem [shape: f32[8,512], index: 2, kind: output, shape index: {}]
  %s3 = sld [smem:[#allocation0]]
  $region18: #{up3d_forward.9} parent=0
    _
  %s5 = ssub.s32 1, %s3
  %s6 = scalar_select 0, %s5, %s3
  // Predicated region
  $region2: #{up3d_forward.9} parent=0 // pred_check
    _
  $region3: #{up3d_forward.9} parent=0 // pred_check_branch
    %8 = sbr.rel (0) target = $region5
  $region4: #{up3d_forward.9} parent=0 // pred_region
    _
  $region5: #{up3d_forward.9} parent=0 // pred_fallthru
    _
  // Predicated region
  $region6: #{up3d_forward.9} parent=0 // pred_check
    _
  $region7: #{up3d_forward.9} parent=0 // pred_check_branch
    %10 = sbr.rel (0) target = $region9
  $region8: #{up3d_forward.9} parent=0 // pred_region
    _
  $region9: #{up3d_forward.9} parent=0 // pred_fallthru
    _
  %v11 = vld [vmem:[%s0] sm:$0xff]
  %v12 = vld [vmem:[%s1] sm:$0xff]
  %v13 = vld [vmem:[%s1 + $0x8] sm:$0xff]
  %16 = vst [vmem:[#allocation1] ss:$2 sm:$0xff] %v12
  %s17 = scalar_lea.vmem [#allocation1], 16
  %18 = vst [vmem:[%s17] ss:$2 sm:$0xff] %v13
  %v19 = vld.sshfl [vmem:[#allocation1] sm:$0xff pattern:$0x75316420]
  %v20 = vld.sshfl [vmem:[#allocation1 + $0x8] sm:$0xff pattern:$0x75316420]
  %v21 = vld.sshfl [vmem:[#allocation1 + $0x10] sm:$0xff pattern:$0x75316420]
  %v22 = vld.sshfl [vmem:[#allocation1 + $0x18] sm:$0xff pattern:$0x75316420]
  %vm23 = vcmask 31744
  %v25 = vsel %vm23, %v11, 0
  %vm27 = vcmask 1043456
  %v28 = vsel %vm27, %v19, 0
  %v30 = vsel %vm27, %v20, 0
  %v32 = vsel %vm27, %v21, 0
  %v34 = vsel %vm27, %v22, 0
  %36 = vmatpush.msra.mxu0 0.0
  %37 = vmatpush.msra.mxu0 0.0
  %38 = vmatpush.msra.mxu0 0.0
  %39 = vmatpush.msra.mxu0 0.0
  %40 = vmatpush.msra.mxu0 0.0
  %41 = vmatpush.msra.mxu0 0.0
  %42 = vmatpush.msra.mxu0 0.0
  %43 = vmatpush.msra.mxu0 0.0
  %44 = vmatpush.msra.mxu0 0.0
  %45 = vmatpush.msra.mxu0 0.0
  %46 = vmatpush.msra.mxu0 0.0
  %47 = vmatpush.msra.mxu0 0.0
  %48 = vmatpush.msra.mxu0 0.0
  %49 = vmatpush.msra.mxu0 0.0
  %50 = vmatpush.msra.mxu0 0.0
  %51 = vmatpush.msra.mxu0 %v28
  %52 = vmatmul.f32.gmra.mxu0 %v25
  %v53 = vpop.f32.mrf.mxu0
  %v54 = vadd.f32 0.0, %v53
  %55 = vdwg.mxu0
  %56 = vmatpush.msra.mxu0 0.0
  %57 = vmatpush.msra.mxu0 0.0
  %58 = vmatpush.msra.mxu0 0.0
  %59 = vmatpush.msra.mxu0 0.0
  %60 = vmatpush.msra.mxu0 0.0
  %61 = vmatpush.msra.mxu0 0.0
  %62 = vmatpush.msra.mxu0 0.0
  %63 = vmatpush.msra.mxu0 0.0
  %64 = vmatpush.msra.mxu0 0.0
  %65 = vmatpush.msra.mxu0 0.0
  %66 = vmatpush.msra.mxu0 0.0
  %67 = vmatpush.msra.mxu0 0.0
  %68 = vmatpush.msra.mxu0 0.0
  %69 = vmatpush.msra.mxu0 0.0
  %70 = vmatpush.msra.mxu0 0.0
  %71 = vmatpush.msra.mxu0 %v30
  %72 = vmatmul.f32.gmra.mxu0 %v25
  %v73 = vpop.f32.mrf.mxu0
  %v74 = vadd.f32 0.0, %v73
  %75 = vdwg.mxu0
  %76 = vmatpush.msra.mxu0 0.0
  %77 = vmatpush.msra.mxu0 0.0
  %78 = vmatpush.msra.mxu0 0.0
  %79 = vmatpush.msra.mxu0 0.0
  %80 = vmatpush.msra.mxu0 0.0
  %81 = vmatpush.msra.mxu0 0.0
  %82 = vmatpush.msra.mxu0 0.0
  %83 = vmatpush.msra.mxu0 0.0
  %84 = vmatpush.msra.mxu0 0.0
  %85 = vmatpush.msra.mxu0 0.0
  %86 = vmatpush.msra.mxu0 0.0
  %87 = vmatpush.msra.mxu0 0.0
  %88 = vmatpush.msra.mxu0 0.0
  %89 = vmatpush.msra.mxu0 0.0
  %90 = vmatpush.msra.mxu0 0.0
  %91 = vmatpush.msra.mxu0 %v32
  %92 = vmatmul.f32.gmra.mxu0 %v25
  %v93 = vpop.f32.mrf.mxu0
  %v94 = vadd.f32 0.0, %v93
  %95 = vdwg.mxu0
  %96 = vmatpush.msra.mxu0 0.0
  %97 = vmatpush.msra.mxu0 0.0
  %98 = vmatpush.msra.mxu0 0.0
  %99 = vmatpush.msra.mxu0 0.0
  %100 = vmatpush.msra.mxu0 0.0
  %101 = vmatpush.msra.mxu0 0.0
  %102 = vmatpush.msra.mxu0 0.0
  %103 = vmatpush.msra.mxu0 0.0
  %104 = vmatpush.msra.mxu0 0.0
  %105 = vmatpush.msra.mxu0 0.0
  %106 = vmatpush.msra.mxu0 0.0
  %107 = vmatpush.msra.mxu0 0.0
  %108 = vmatpush.msra.mxu0 0.0
  %109 = vmatpush.msra.mxu0 0.0
  %110 = vmatpush.msra.mxu0 0.0
  %111 = vmatpush.msra.mxu0 %v34
  %112 = vmatmul.f32.gmra.mxu0 %v25
  %v113 = vpop.f32.mrf.mxu0
  %v114 = vadd.f32 0.0, %v113
  %115 = vdwg.mxu0
  %116 = vst [vmem:[%s2] sm:$0xff] %v54
  %117 = vst [vmem:[%s2 + $0x8] sm:$0xff] %v74
  %118 = vst [vmem:[%s2 + $0x10] sm:$0xff] %v94
  %119 = vst [vmem:[%s2 + $0x18] sm:$0xff] %v114
  // Predicated region
  $region10: #{up3d_forward.9} parent=0 // pred_check
    _
  $region11: #{up3d_forward.9} parent=0 // pred_check_branch
    %121 = sbr.rel (0) target = $region13
  $region12: #{up3d_forward.9} parent=0 // pred_region
    _
  $region13: #{up3d_forward.9} parent=0 // pred_fallthru
    _
  // Predicated region
  $region14: #{up3d_forward.9} parent=0 // pred_check
    _
  $region15: #{up3d_forward.9} parent=0 // pred_check_branch
    %123 = sbr.rel (0) target = $region17
  $region16: #{up3d_forward.9} parent=0 // pred_region
    _
  $region17: #{up3d_forward.9} parent=0 // pred_fallthru
    _

// kernel: up3d_forward.10
$region0: #{up3d_forward.10}
  #allocation0 [shape = 'u32[]', space=smem, size = 0x4, offset = 0x4, fixed_abs, tag = 'smem constant byte address 0x4 - core index']
  #allocation1 [shape = 'u32[72,128]{1,0:T(1,128)}', space=vmem, size = 0x9000, scoped, tag = 'internal scratch']
  #allocation2 [shape = 'f32[4,1]{1,0:T(4,128)}', space=vmem, size = 0x800, scoped, tag = 'scratch operand']
  #allocation3 [shape = 'f32[4,1]{1,0:T(4,128)}', space=vmem, size = 0x800, scoped, tag = 'scratch operand']
  %s0 = inlined_call_operand.vmem [shape: bf16[2,8,1152], index: 0, kind: input, shape index: {}]
  %s1 = inlined_call_operand.vmem [shape: bf16[4,216], index: 1, kind: input, shape index: {}]
  %s2 = inlined_call_operand.vmem [shape: f32[1,896], index: 2, kind: input, shape index: {}]
  %s3 = inlined_call_operand.vmem [shape: f32[2,4,896], index: 3, kind: output, shape index: {0}]
  %s4 = inlined_call_operand.vmem [shape: f32[4,1], index: 4, kind: output, shape index: {1}]
  %s5 = inlined_call_operand.vmem [shape: f32[4,1], index: 5, kind: output, shape index: {2}]
  %6 = xla_tuple %s3, %s4, %s5
  %s7 = sld [smem:[#allocation0]]
  $region69: #{up3d_forward.10} parent=0
    _
  %s9 = ssub.s32 1, %s7
  %s10 = scalar_select 0, %s9, %s7
  loop: start=0, step=1, limit=4
  $region2: #{up3d_forward.10} parent=0 // loop_pre_header
    _
  $region3: #{up3d_forward.10} parent=0 // loop_header
    %s12 = sphi 0, %s16
    %p13 = scmp.ge.s32.totalorder %s12, 4
    %s22 = sphi 0, %s24
    %s25 = sphi 0, %s22
    %s26 = sphi 0, %s25
    %s42 = sphi 0, %s26
    %s46 = sphi 0, %s46
    %s48 = sphi 0, %s46
    %s49 = sphi 0, %s48
    %s63 = sphi 0, %s49
    %s67 = sphi 0, %s67
    %s69 = sphi 0, %s67
    %s70 = sphi 0, %s69
    %s84 = sphi 0, %s70
    %s90 = sphi 0, %s92
    %s93 = sphi 0, %s90
    %s94 = sphi 0, %s93
    %s110 = sphi 0, %s94
    %s114 = sphi 0, %s114
    %s116 = sphi 0, %s114
    %s117 = sphi 0, %s116
    %s131 = sphi 0, %s117
    %s135 = sphi 0, %s135
    %s137 = sphi 0, %s135
    %s138 = sphi 0, %s137
    %s152 = sphi 0, %s138
  $region4: #{up3d_forward.10} parent=0 // loop_header_branch
    %15 = sbr.rel (%p13) target = $region8
  $region5: #{up3d_forward.10} parent=0 // loop_body
    %s17 = ssub.s32 %s12, 1
    %s18 = ssub.s32 %s12, 2
    %s19 = sadd.s32 %s12, 1
    %s20 = ssub.s32 %s12, %s19
    %p21 = scmp.eq.s32.totalorder %s20, 0
    %s23 = sadd.s32 %s22, 1
    %s24 = scalar_select %p21, %s22, %s23
    %p27 = pneg %p21
    %p28 = scmp.eq.s32.totalorder %s12, 1
    %p29 = por %p27, %p28
    %p30 = scmp.ne.s32.totalorder %s22, %s25
    %p31 = scmp.eq.s32.totalorder %s12, 0
    %p32 = por %p30, %p31
    %p33 = scmp.ne.s32.totalorder %s22, %s25
    %p34 = scmp.eq.s32.totalorder %s17, 1
    %p35 = por %p33, %p34
    %p36 = scmp.ne.s32.totalorder %s25, %s26
    %p37 = scmp.eq.s32.totalorder %s17, 0
    %p38 = por %p36, %p37
    %p39 = scmp.ne.s32.totalorder %s25, %s26
    %p40 = scmp.eq.s32.totalorder %s18, 1
    %p41 = por %p39, %p40
    %p43 = scmp.ne.s32.totalorder %s26, %s42
    %p44 = scmp.eq.s32.totalorder %s18, 0
    %p45 = por %p43, %p44
    %s47 = sadd.s32 %s46, 1
    %p50 = scmp.eq.s32.totalorder %s12, 1
    %p51 = scmp.ne.s32.totalorder %s46, %s48
    %p52 = scmp.eq.s32.totalorder %s12, 0
    %p53 = por %p51, %p52
    %p54 = scmp.ne.s32.totalorder %s46, %s48
    %p55 = scmp.eq.s32.totalorder %s17, 1
    %p56 = por %p54, %p55
    %p57 = scmp.ne.s32.totalorder %s48, %s49
    %p58 = scmp.eq.s32.totalorder %s17, 0
    %p59 = por %p57, %p58
    %p60 = scmp.ne.s32.totalorder %s48, %s49
    %p61 = scmp.eq.s32.totalorder %s18, 1
    %p62 = por %p60, %p61
    %p64 = scmp.ne.s32.totalorder %s49, %s63
    %p65 = scmp.eq.s32.totalorder %s18, 0
    %p66 = por %p64, %p65
    %s68 = sadd.s32 %s67, 1
    %p71 = scmp.eq.s32.totalorder %s12, 1
    %p72 = scmp.ne.s32.totalorder %s67, %s69
    %p73 = scmp.eq.s32.totalorder %s12, 0
    %p74 = por %p72, %p73
    %p75 = scmp.ne.s32.totalorder %s67, %s69
    %p76 = scmp.eq.s32.totalorder %s17, 1
    %p77 = por %p75, %p76
    %p78 = scmp.ne.s32.totalorder %s69, %s70
    %p79 = scmp.eq.s32.totalorder %s17, 0
    %p80 = por %p78, %p79
    %p81 = scmp.ne.s32.totalorder %s69, %s70
    %p82 = scmp.eq.s32.totalorder %s18, 1
    %p83 = por %p81, %p82
    %p85 = scmp.ne.s32.totalorder %s70, %s84
    %p86 = scmp.eq.s32.totalorder %s18, 0
    %p87 = por %p85, %p86
    %s88 = ssub.s32 %s12, %s19
    %p89 = scmp.eq.s32.totalorder %s88, 0
    %s91 = sadd.s32 %s90, 1
    %s92 = scalar_select %p89, %s90, %s91
    %p95 = pneg %p89
    %p96 = scmp.eq.s32.totalorder %s12, 1
    %p97 = por %p95, %p96
    %p98 = scmp.ne.s32.totalorder %s90, %s93
    %p99 = scmp.eq.s32.totalorder %s12, 0
    %p100 = por %p98, %p99
    %p101 = scmp.ne.s32.totalorder %s90, %s93
    %p102 = scmp.eq.s32.totalorder %s17, 1
    %p103 = por %p101, %p102
    %p104 = scmp.ne.s32.totalorder %s93, %s94
    %p105 = scmp.eq.s32.totalorder %s17, 0
    %p106 = por %p104, %p105
    %p107 = scmp.ne.s32.totalorder %s93, %s94
    %p108 = scmp.eq.s32.totalorder %s18, 1
    %p109 = por %p107, %p108
    %p111 = scmp.ne.s32.totalorder %s94, %s110
    %p112 = scmp.eq.s32.totalorder %s18, 0
    %p113 = por %p111, %p112
    %s115 = sadd.s32 %s114, 1
    %p118 = scmp.eq.s32.totalorder %s12, 1
    %p119 = scmp.ne.s32.totalorder %s114, %s116
    %p120 = scmp.eq.s32.totalorder %s12, 0
    %p121 = por %p119, %p120
    %p122 = scmp.ne.s32.totalorder %s114, %s116
    %p123 = scmp.eq.s32.totalorder %s17, 1
    %p124 = por %p122, %p123
    %p125 = scmp.ne.s32.totalorder %s116, %s117
    %p126 = scmp.eq.s32.totalorder %s17, 0
    %p127 = por %p125, %p126
    %p128 = scmp.ne.s32.totalorder %s116, %s117
    %p129 = scmp.eq.s32.totalorder %s18, 1
    %p130 = por %p128, %p129
    %p132 = scmp.ne.s32.totalorder %s117, %s131
    %p133 = scmp.eq.s32.totalorder %s18, 0
    %p134 = por %p132, %p133
    %s136 = sadd.s32 %s135, 1
    %p139 = scmp.eq.s32.totalorder %s12, 1
    %p140 = scmp.ne.s32.totalorder %s135, %s137
    %p141 = scmp.eq.s32.totalorder %s12, 0
    %p142 = por %p140, %p141
    %p143 = scmp.ne.s32.totalorder %s135, %s137
    %p144 = scmp.eq.s32.totalorder %s17, 1
    %p145 = por %p143, %p144
    %p146 = scmp.ne.s32.totalorder %s137, %s138
    %p147 = scmp.eq.s32.totalorder %s17, 0
    %p148 = por %p146, %p147
    %p149 = scmp.ne.s32.totalorder %s137, %s138
    %p150 = scmp.eq.s32.totalorder %s18, 1
    %p151 = por %p149, %p150
    %p153 = scmp.ne.s32.totalorder %s138, %s152
    %p154 = scmp.eq.s32.totalorder %s18, 0
    %p155 = por %p153, %p154
    %p156 = scmp.le.s32.totalorder 1, %s12
    %p157 = scmp.lt.s32.totalorder %s12, 3
    %p158 = pnand %p156, %p157
    %p159 = pneg %p158
    // Predicated region
    $region9: #{up3d_forward.10} parent=5 // pred_check
      _
    $region10: #{up3d_forward.10} parent=5 // pred_check_branch
      %161 = sbr.rel (%p158) target = $region12
    $region11: #{up3d_forward.10} parent=5 // pred_region
      %s162 = ssub.s32 %s12, 1
      // Predicated region
      $region13: #{up3d_forward.10} parent=11 // pred_check
        %p163 = pneg %p59
      $region14: #{up3d_forward.10} parent=11 // pred_check_branch
        %165 = sbr.rel (%p163) target = $region16
      $region15: #{up3d_forward.10} parent=11 // pred_region
        _
      $region16: #{up3d_forward.10} parent=11 // pred_fallthru
        _
      // Predicated region
      $region17: #{up3d_forward.10} parent=11 // pred_check
        %p166 = pneg %p80
      $region18: #{up3d_forward.10} parent=11 // pred_check_branch
        %168 = sbr.rel (%p166) target = $region20
      $region19: #{up3d_forward.10} parent=11 // pred_region
        _
      $region20: #{up3d_forward.10} parent=11 // pred_fallthru
        _
    $region12: #{up3d_forward.10} parent=5 // pred_fallthru
      _
    %p169 = scmp.lt.s32.totalorder %s12, 2
    // Predicated region
    $region21: #{up3d_forward.10} parent=5 // pred_check
      %p170 = pneg %p169
    $region22: #{up3d_forward.10} parent=5 // pred_check_branch
      %172 = sbr.rel (%p170) target = $region24
    $region23: #{up3d_forward.10} parent=5 // pred_region
      // Predicated region
      $region25: #{up3d_forward.10} parent=23 // pred_check
        %p173 = pneg %p32
      $region26: #{up3d_forward.10} parent=23 // pred_check_branch
        %175 = sbr.rel (%p173) target = $region28
      $region27: #{up3d_forward.10} parent=23 // pred_region
        %p176 = scmp.lt.s32.totalorder %s12, 1
        %s177 = scalar_select %p176, %s12, 1
        %s178 = smul.addr %s177, 9
        %s179 = smul.addr %s178, 4
        %s180 = scalar_lea.vmem %s0, %s179
      $region28: #{up3d_forward.10} parent=23 // pred_fallthru
        _
    $region24: #{up3d_forward.10} parent=5 // pred_fallthru
      _
    %p181 = scmp.le.s32.totalorder 1, %s12
    %p182 = scmp.lt.s32.totalorder %s12, 3
    %p183 = pnand %p181, %p182
    %p184 = pneg %p183
    // Predicated region
    $region29: #{up3d_forward.10} parent=5 // pred_check
      _
    $region30: #{up3d_forward.10} parent=5 // pred_check_branch
      %186 = sbr.rel (%p183) target = $region32
    $region31: #{up3d_forward.10} parent=5 // pred_region
      %s187 = ssub.s32 %s12, 1
      %p188 = scmp.lt.s32.totalorder %s17, 1
      %s189 = scalar_select %p188, %s17, 1
      %s190 = smul.addr %s189, 9
      %s191 = smul.addr %s190, 4
      %s192 = scalar_lea.vmem %s0, %s191
      %p193 = pneg %p38
      %p194 = pneg %p35
      %p195 = pneg %p59
      %p196 = pneg %p56
      %p197 = pneg %p80
      %p198 = pneg %p77
      %p199 = pneg %p106
      %p200 = pneg %p103
      %p201 = scmp.lt.s32.totalorder %s17, 1
      %s202 = scalar_select %p201, %s17, 1
      %s203 = smul.addr %s202, 7
      %s204 = smul.addr %s203, 4
      %s205 = scalar_lea.vmem %s3, %s204
      %p206 = pneg %p127
      %p207 = pneg %p124
      %p208 = pneg %p148
      %p209 = pneg %p145
      %p210 = scmp.lt.s32.totalorder %s17, 1
      %s211 = scalar_select %p210, %s17, 1
      %s212 = smul.addr %s211, 9
      %s213 = smul.addr %s212, 4
      %s214 = scalar_lea.vmem %s0, %s213
      %p215 = scmp.lt.s32.totalorder %s17, 1
      %s216 = scalar_select %p215, %s17, 1
      %s217 = smul.addr %s216, 7
      %s218 = smul.addr %s217, 4
      %s219 = scalar_lea.vmem %s3, %s218
      %v221 = vld [vmem:[%s214] sm:$0xff]
      %v222 = vld [vmem:[%s214 + $0x8] sm:$0xff]
      %v223 = vld [vmem:[%s214 + $0x10] sm:$0xff]
      %v224 = vld [vmem:[%s214 + $0x18] sm:$0xff]
      %v225 = vld [vmem:[%s214 + $0x20] sm:$0xf]
      %v226 = vunpack.c.l.bf16 %v221
      %v227 = vunpack.c.h.bf16 %v221
      %v228 = vunpack.c.l.bf16 %v222
      %v229 = vunpack.c.h.bf16 %v222
      %v230 = vunpack.c.l.bf16 %v223
      %v231 = vunpack.c.h.bf16 %v223
      %v232 = vunpack.c.l.bf16 %v224
      %v233 = vunpack.c.h.bf16 %v224
      %v234 = vunpack.c.l.bf16 %v225
      %243 = vrot.lane.b32.xlu0 %v226, 127
      %v244 = vpop.permute.xlu0 %243
      %245 = vrot.lane.b32.xlu0 %v227, 127
      %v246 = vpop.permute.xlu0 %245
      %247 = vrot.lane.b32.xlu0 %v228, 127
      %v248 = vpop.permute.xlu0 %247
      %249 = vrot.lane.b32.xlu0 %v229, 127
      %v250 = vpop.permute.xlu0 %249
      %251 = vrot.lane.b32.xlu0 %v230, 127
      %v252 = vpop.permute.xlu0 %251
      %253 = vrot.lane.b32.xlu0 %v231, 127
      %v254 = vpop.permute.xlu0 %253
      %255 = vrot.lane.b32.xlu0 %v232, 127
      %v256 = vpop.permute.xlu0 %255
      %257 = vrot.lane.b32.xlu0 %v233, 127
      %v258 = vpop.permute.xlu0 %257
      %vm259 = vcmask 1039360
      %v260 = vsel %vm259, %v244, %v246
      %v261 = vsel %vm259, %v246, %v248
      %v262 = vsel %vm259, %v248, %v250
      %v263 = vsel %vm259, %v250, %v252
      %v264 = vsel %vm259, %v252, %v254
      %v265 = vsel %vm259, %v254, %v256
      %v266 = vsel %vm259, %v256, %v258
      %274 = vrot.lane.b32.xlu0 %v226, 126
      %v275 = vpop.permute.xlu0 %274
      %276 = vrot.lane.b32.xlu0 %v227, 126
      %v277 = vpop.permute.xlu0 %276
      %278 = vrot.lane.b32.xlu0 %v228, 126
      %v279 = vpop.permute.xlu0 %278
      %280 = vrot.lane.b32.xlu0 %v229, 126
      %v281 = vpop.permute.xlu0 %280
      %282 = vrot.lane.b32.xlu0 %v230, 126
      %v283 = vpop.permute.xlu0 %282
      %284 = vrot.lane.b32.xlu0 %v231, 126
      %v285 = vpop.permute.xlu0 %284
      %286 = vrot.lane.b32.xlu0 %v232, 126
      %v287 = vpop.permute.xlu0 %286
      %288 = vrot.lane.b32.xlu0 %v233, 126
      %v289 = vpop.permute.xlu0 %288
      %vm290 = vcmask 1031168
      %v291 = vsel %vm290, %v275, %v277
      %v292 = vsel %vm290, %v277, %v279
      %v293 = vsel %vm290, %v279, %v281
      %v294 = vsel %vm290, %v281, %v283
      %v295 = vsel %vm290, %v283, %v285
      %v296 = vsel %vm290, %v285, %v287
      %v297 = vsel %vm290, %v287, %v289
      %305 = vrot.lane.b32.xlu0 %v226, 118
      %v306 = vpop.permute.xlu0 %305
      %307 = vrot.lane.b32.xlu0 %v227, 118
      %v308 = vpop.permute.xlu0 %307
      %309 = vrot.lane.b32.xlu0 %v228, 118
      %v310 = vpop.permute.xlu0 %309
      %311 = vrot.lane.b32.xlu0 %v229, 118
      %v312 = vpop.permute.xlu0 %311
      %313 = vrot.lane.b32.xlu0 %v230, 118
      %v314 = vpop.permute.xlu0 %313
      %315 = vrot.lane.b32.xlu0 %v231, 118
      %v316 = vpop.permute.xlu0 %315
      %317 = vrot.lane.b32.xlu0 %v232, 118
      %v318 = vpop.permute.xlu0 %317
      %319 = vrot.lane.b32.xlu0 %v233, 118
      %v320 = vpop.permute.xlu0 %319
      %vm321 = vcmask 965632
      %v322 = vsel %vm321, %v306, %v308
      %v323 = vsel %vm321, %v308, %v310
      %v324 = vsel %vm321, %v310, %v312
      %v325 = vsel %vm321, %v312, %v314
      %v326 = vsel %vm321, %v314, %v316
      %v327 = vsel %vm321, %v316, %v318
      %v328 = vsel %vm321, %v318, %v320
      %336 = vrot.lane.b32.xlu0 %v226, 117
      %v337 = vpop.permute.xlu0 %336
      %338 = vrot.lane.b32.xlu0 %v227, 117
      %v339 = vpop.permute.xlu0 %338
      %340 = vrot.lane.b32.xlu0 %v228, 117
      %v341 = vpop.permute.xlu0 %340
      %342 = vrot.lane.b32.xlu0 %v229, 117
      %v343 = vpop.permute.xlu0 %342
      %344 = vrot.lane.b32.xlu0 %v230, 117
      %v345 = vpop.permute.xlu0 %344
      %346 = vrot.lane.b32.xlu0 %v231, 117
      %v347 = vpop.permute.xlu0 %346
      %348 = vrot.lane.b32.xlu0 %v232, 117
      %v349 = vpop.permute.xlu0 %348
      %350 = vrot.lane.b32.xlu0 %v233, 117
      %v351 = vpop.permute.xlu0 %350
      %vm352 = vcmask 957440
      %v353 = vsel %vm352, %v337, %v339
      %v354 = vsel %vm352, %v339, %v341
      %v355 = vsel %vm352, %v341, %v343
      %v356 = vsel %vm352, %v343, %v345
      %v357 = vsel %vm352, %v345, %v347
      %v358 = vsel %vm352, %v347, %v349
      %v359 = vsel %vm352, %v349, %v351
      %367 = vrot.lane.b32.xlu0 %v226, 116
      %v368 = vpop.permute.xlu0 %367
      %369 = vrot.lane.b32.xlu0 %v227, 116
      %v370 = vpop.permute.xlu0 %369
      %371 = vrot.lane.b32.xlu0 %v228, 116
      %v372 = vpop.permute.xlu0 %371
      %373 = vrot.lane.b32.xlu0 %v229, 116
      %v374 = vpop.permute.xlu0 %373
      %375 = vrot.lane.b32.xlu0 %v230, 116
      %v376 = vpop.permute.xlu0 %375
      %377 = vrot.lane.b32.xlu0 %v231, 116
      %v378 = vpop.permute.xlu0 %377
      %379 = vrot.lane.b32.xlu0 %v232, 116
      %v380 = vpop.permute.xlu0 %379
      %381 = vrot.lane.b32.xlu0 %v233, 116
      %v382 = vpop.permute.xlu0 %381
      %vm383 = vcmask 949248
      %v384 = vsel %vm383, %v368, %v370
      %v385 = vsel %vm383, %v370, %v372
      %v386 = vsel %vm383, %v372, %v374
      %v387 = vsel %vm383, %v374, %v376
      %v388 = vsel %vm383, %v376, %v378
      %v389 = vsel %vm383, %v378, %v380
      %v390 = vsel %vm383, %v380, %v382
      %398 = vrot.lane.b32.xlu0 %v226, 108
      %v399 = vpop.permute.xlu0 %398
      %400 = vrot.lane.b32.xlu0 %v227, 108
      %v401 = vpop.permute.xlu0 %400
      %402 = vrot.lane.b32.xlu0 %v228, 108
      %v403 = vpop.permute.xlu0 %402
      %404 = vrot.lane.b32.xlu0 %v229, 108
      %v405 = vpop.permute.xlu0 %404
      %406 = vrot.lane.b32.xlu0 %v230, 108
      %v407 = vpop.permute.xlu0 %406
      %408 = vrot.lane.b32.xlu0 %v231, 108
      %v409 = vpop.permute.xlu0 %408
      %410 = vrot.lane.b32.xlu0 %v232, 108
      %v411 = vpop.permute.xlu0 %410
      %412 = vrot.lane.b32.xlu0 %v233, 108
      %v413 = vpop.permute.xlu0 %412
      %vm414 = vcmask 883712
      %v415 = vsel %vm414, %v399, %v401
      %v416 = vsel %vm414, %v401, %v403
      %v417 = vsel %vm414, %v403, %v405
      %v418 = vsel %vm414, %v405, %v407
      %v419 = vsel %vm414, %v407, %v409
      %v420 = vsel %vm414, %v409, %v411
      %v421 = vsel %vm414, %v411, %v413
      %429 = vrot.lane.b32.xlu0 %v226, 107
      %v430 = vpop.permute.xlu0 %429
      %431 = vrot.lane.b32.xlu0 %v227, 107
      %v432 = vpop.permute.xlu0 %431
      %433 = vrot.lane.b32.xlu0 %v228, 107
      %v434 = vpop.permute.xlu0 %433
      %435 = vrot.lane.b32.xlu0 %v229, 107
      %v436 = vpop.permute.xlu0 %435
      %437 = vrot.lane.b32.xlu0 %v230, 107
      %v438 = vpop.permute.xlu0 %437
      %439 = vrot.lane.b32.xlu0 %v231, 107
      %v440 = vpop.permute.xlu0 %439
      %441 = vrot.lane.b32.xlu0 %v232, 107
      %v442 = vpop.permute.xlu0 %441
      %443 = vrot.lane.b32.xlu0 %v233, 107
      %v444 = vpop.permute.xlu0 %443
      %vm445 = vcmask 875520
      %v446 = vsel %vm445, %v430, %v432
      %v447 = vsel %vm445, %v432, %v434
      %v448 = vsel %vm445, %v434, %v436
      %v449 = vsel %vm445, %v436, %v438
      %v450 = vsel %vm445, %v438, %v440
      %v451 = vsel %vm445, %v440, %v442
      %v452 = vsel %vm445, %v442, %v444
      %460 = vrot.lane.b32.xlu0 %v226, 106
      %v461 = vpop.permute.xlu0 %460
      %462 = vrot.lane.b32.xlu0 %v227, 106
      %v463 = vpop.permute.xlu0 %462
      %464 = vrot.lane.b32.xlu0 %v228, 106
      %v465 = vpop.permute.xlu0 %464
      %466 = vrot.lane.b32.xlu0 %v229, 106
      %v467 = vpop.permute.xlu0 %466
      %468 = vrot.lane.b32.xlu0 %v230, 106
      %v469 = vpop.permute.xlu0 %468
      %470 = vrot.lane.b32.xlu0 %v231, 106
      %v471 = vpop.permute.xlu0 %470
      %472 = vrot.lane.b32.xlu0 %v232, 106
      %v473 = vpop.permute.xlu0 %472
      %474 = vrot.lane.b32.xlu0 %v233, 106
      %v475 = vpop.permute.xlu0 %474
      %vm476 = vcmask 867328
      %v477 = vsel %vm476, %v461, %v463
      %v478 = vsel %vm476, %v463, %v465
      %v479 = vsel %vm476, %v465, %v467
      %v480 = vsel %vm476, %v467, %v469
      %v481 = vsel %vm476, %v469, %v471
      %v482 = vsel %vm476, %v471, %v473
      %v483 = vsel %vm476, %v473, %v475
      %491 = vrot.lane.b32.xlu0 %v226, 28
      %v492 = vpop.permute.xlu0 %491
      %493 = vrot.lane.b32.xlu0 %v227, 28
      %v494 = vpop.permute.xlu0 %493
      %495 = vrot.lane.b32.xlu0 %v228, 28
      %v496 = vpop.permute.xlu0 %495
      %497 = vrot.lane.b32.xlu0 %v229, 28
      %v498 = vpop.permute.xlu0 %497
      %499 = vrot.lane.b32.xlu0 %v230, 28
      %v500 = vpop.permute.xlu0 %499
      %501 = vrot.lane.b32.xlu0 %v231, 28
      %v502 = vpop.permute.xlu0 %501
      %503 = vrot.lane.b32.xlu0 %v232, 28
      %v504 = vpop.permute.xlu0 %503
      %505 = vrot.lane.b32.xlu0 %v233, 28
      %v506 = vpop.permute.xlu0 %505
      %vm507 = vcmask 228352
      %v508 = vsel %vm507, %v492, %v494
      %v509 = vsel %vm507, %v494, %v496
      %v510 = vsel %vm507, %v496, %v498
      %v511 = vsel %vm507, %v498, %v500
      %v512 = vsel %vm507, %v500, %v502
      %v513 = vsel %vm507, %v502, %v504
      %v514 = vsel %vm507, %v504, %v506
      %522 = vrot.lane.b32.xlu0 %v226, 27
      %v523 = vpop.permute.xlu0 %522
      %524 = vrot.lane.b32.xlu0 %v227, 27
      %v525 = vpop.permute.xlu0 %524
      %526 = vrot.lane.b32.xlu0 %v228, 27
      %v527 = vpop.permute.xlu0 %526
      %528 = vrot.lane.b32.xlu0 %v229, 27
      %v529 = vpop.permute.xlu0 %528
      %530 = vrot.lane.b32.xlu0 %v230, 27
      %v531 = vpop.permute.xlu0 %530
      %532 = vrot.lane.b32.xlu0 %v231, 27
      %v533 = vpop.permute.xlu0 %532
      %534 = vrot.lane.b32.xlu0 %v232, 27
      %v535 = vpop.permute.xlu0 %534
      %536 = vrot.lane.b32.xlu0 %v233, 27
      %v537 = vpop.permute.xlu0 %536
      %vm538 = vcmask 220160
      %v539 = vsel %vm538, %v523, %v525
      %v540 = vsel %vm538, %v525, %v527
      %v541 = vsel %vm538, %v527, %v529
      %v542 = vsel %vm538, %v529, %v531
      %v543 = vsel %vm538, %v531, %v533
      %v544 = vsel %vm538, %v533, %v535
      %v545 = vsel %vm538, %v535, %v537
      %553 = vrot.lane.b32.xlu0 %v226, 26
      %v554 = vpop.permute.xlu0 %553
      %555 = vrot.lane.b32.xlu0 %v227, 26
      %v556 = vpop.permute.xlu0 %555
      %557 = vrot.lane.b32.xlu0 %v228, 26
      %v558 = vpop.permute.xlu0 %557
      %559 = vrot.lane.b32.xlu0 %v229, 26
      %v560 = vpop.permute.xlu0 %559
      %561 = vrot.lane.b32.xlu0 %v230, 26
      %v562 = vpop.permute.xlu0 %561
      %563 = vrot.lane.b32.xlu0 %v231, 26
      %v564 = vpop.permute.xlu0 %563
      %565 = vrot.lane.b32.xlu0 %v232, 26
      %v566 = vpop.permute.xlu0 %565
      %567 = vrot.lane.b32.xlu0 %v233, 26
      %v568 = vpop.permute.xlu0 %567
      %vm569 = vcmask 211968
      %v570 = vsel %vm569, %v554, %v556
      %v571 = vsel %vm569, %v556, %v558
      %v572 = vsel %vm569, %v558, %v560
      %v573 = vsel %vm569, %v560, %v562
      %v574 = vsel %vm569, %v562, %v564
      %v575 = vsel %vm569, %v564, %v566
      %v576 = vsel %vm569, %v566, %v568
      %584 = vrot.lane.b32.xlu0 %v226, 18
      %v585 = vpop.permute.xlu0 %584
      %586 = vrot.lane.b32.xlu0 %v227, 18
      %v587 = vpop.permute.xlu0 %586
      %588 = vrot.lane.b32.xlu0 %v228, 18
      %v589 = vpop.permute.xlu0 %588
      %590 = vrot.lane.b32.xlu0 %v229, 18
      %v591 = vpop.permute.xlu0 %590
      %592 = vrot.lane.b32.xlu0 %v230, 18
      %v593 = vpop.permute.xlu0 %592
      %594 = vrot.lane.b32.xlu0 %v231, 18
      %v595 = vpop.permute.xlu0 %594
      %596 = vrot.lane.b32.xlu0 %v232, 18
      %v597 = vpop.permute.xlu0 %596
      %598 = vrot.lane.b32.xlu0 %v233, 18
      %v599 = vpop.permute.xlu0 %598
      %vm600 = vcmask 146432
      %v601 = vsel %vm600, %v585, %v587
      %v602 = vsel %vm600, %v587, %v589
      %v603 = vsel %vm600, %v589, %v591
      %v604 = vsel %vm600, %v591, %v593
      %v605 = vsel %vm600, %v593, %v595
      %v606 = vsel %vm600, %v595, %v597
      %v607 = vsel %vm600, %v597, %v599
      %615 = vrot.lane.b32.xlu0 %v226, 17
      %v616 = vpop.permute.xlu0 %615
      %617 = vrot.lane.b32.xlu0 %v227, 17
      %v618 = vpop.permute.xlu0 %617
      %619 = vrot.lane.b32.xlu0 %v228, 17
      %v620 = vpop.permute.xlu0 %619
      %621 = vrot.lane.b32.xlu0 %v229, 17
      %v622 = vpop.permute.xlu0 %621
      %623 = vrot.lane.b32.xlu0 %v230, 17
      %v624 = vpop.permute.xlu0 %623
      %625 = vrot.lane.b32.xlu0 %v231, 17
      %v626 = vpop.permute.xlu0 %625
      %627 = vrot.lane.b32.xlu0 %v232, 17
      %v628 = vpop.permute.xlu0 %627
      %629 = vrot.lane.b32.xlu0 %v233, 17
      %v630 = vpop.permute.xlu0 %629
      %vm631 = vcmask 138240
      %v632 = vsel %vm631, %v616, %v618
      %v633 = vsel %vm631, %v618, %v620
      %v634 = vsel %vm631, %v620, %v622
      %v635 = vsel %vm631, %v622, %v624
      %v636 = vsel %vm631, %v624, %v626
      %v637 = vsel %vm631, %v626, %v628
      %v638 = vsel %vm631, %v628, %v630
      %646 = vrot.lane.b32.xlu0 %v226, 16
      %v647 = vpop.permute.xlu0 %646
      %648 = vrot.lane.b32.xlu0 %v227, 16
      %v649 = vpop.permute.xlu0 %648
      %650 = vrot.lane.b32.xlu0 %v228, 16
      %v651 = vpop.permute.xlu0 %650
      %652 = vrot.lane.b32.xlu0 %v229, 16
      %v653 = vpop.permute.xlu0 %652
      %654 = vrot.lane.b32.xlu0 %v230, 16
      %v655 = vpop.permute.xlu0 %654
      %656 = vrot.lane.b32.xlu0 %v231, 16
      %v657 = vpop.permute.xlu0 %656
      %658 = vrot.lane.b32.xlu0 %v232, 16
      %v659 = vpop.permute.xlu0 %658
      %660 = vrot.lane.b32.xlu0 %v233, 16
      %v661 = vpop.permute.xlu0 %660
      %vm662 = vcmask 130048
      %v663 = vsel %vm662, %v647, %v649
      %v664 = vsel %vm662, %v649, %v651
      %v665 = vsel %vm662, %v651, %v653
      %v666 = vsel %vm662, %v653, %v655
      %v667 = vsel %vm662, %v655, %v657
      %v668 = vsel %vm662, %v657, %v659
      %v669 = vsel %vm662, %v659, %v661
      %677 = vrot.lane.b32.xlu0 %v226, 8
      %v678 = vpop.permute.xlu0 %677
      %679 = vrot.lane.b32.xlu0 %v227, 8
      %v680 = vpop.permute.xlu0 %679
      %681 = vrot.lane.b32.xlu0 %v228, 8
      %v682 = vpop.permute.xlu0 %681
      %683 = vrot.lane.b32.xlu0 %v229, 8
      %v684 = vpop.permute.xlu0 %683
      %685 = vrot.lane.b32.xlu0 %v230, 8
      %v686 = vpop.permute.xlu0 %685
      %687 = vrot.lane.b32.xlu0 %v231, 8
      %v688 = vpop.permute.xlu0 %687
      %689 = vrot.lane.b32.xlu0 %v232, 8
      %v690 = vpop.permute.xlu0 %689
      %691 = vrot.lane.b32.xlu0 %v233, 8
      %v692 = vpop.permute.xlu0 %691
      %vm693 = vcmask 64512
      %v694 = vsel %vm693, %v678, %v680
      %v695 = vsel %vm693, %v680, %v682
      %v696 = vsel %vm693, %v682, %v684
      %v697 = vsel %vm693, %v684, %v686
      %v698 = vsel %vm693, %v686, %v688
      %v699 = vsel %vm693, %v688, %v690
      %v700 = vsel %vm693, %v690, %v692
      %709 = vrot.lane.b32.xlu0 %v227, 49
      %v710 = vpop.permute.xlu0 %709
      %711 = vrot.lane.b32.xlu0 %v228, 49
      %v712 = vpop.permute.xlu0 %711
      %713 = vrot.lane.b32.xlu0 %v229, 49
      %v714 = vpop.permute.xlu0 %713
      %715 = vrot.lane.b32.xlu0 %v230, 49
      %v716 = vpop.permute.xlu0 %715
      %717 = vrot.lane.b32.xlu0 %v231, 49
      %v718 = vpop.permute.xlu0 %717
      %719 = vrot.lane.b32.xlu0 %v232, 49
      %v720 = vpop.permute.xlu0 %719
      %721 = vrot.lane.b32.xlu0 %v233, 49
      %v722 = vpop.permute.xlu0 %721
      %723 = vrot.lane.b32.xlu0 %v234, 49
      %v724 = vpop.permute.xlu0 %723
      %vm725 = vcmask 400384
      %v726 = vsel %vm725, %v710, %v712
      %v727 = vsel %vm725, %v712, %v714
      %v728 = vsel %vm725, %v714, %v716
      %v729 = vsel %vm725, %v716, %v718
      %v730 = vsel %vm725, %v718, %v720
      %v731 = vsel %vm725, %v720, %v722
      %v732 = vsel %vm725, %v722, %v724
      %733 = vrot.lane.b32.xlu0 %v227, 48
      %v734 = vpop.permute.xlu0 %733
      %735 = vrot.lane.b32.xlu0 %v228, 48
      %v736 = vpop.permute.xlu0 %735
      %737 = vrot.lane.b32.xlu0 %v229, 48
      %v738 = vpop.permute.xlu0 %737
      %739 = vrot.lane.b32.xlu0 %v230, 48
      %v740 = vpop.permute.xlu0 %739
      %741 = vrot.lane.b32.xlu0 %v231, 48
      %v742 = vpop.permute.xlu0 %741
      %743 = vrot.lane.b32.xlu0 %v232, 48
      %v744 = vpop.permute.xlu0 %743
      %745 = vrot.lane.b32.xlu0 %v233, 48
      %v746 = vpop.permute.xlu0 %745
      %747 = vrot.lane.b32.xlu0 %v234, 48
      %v748 = vpop.permute.xlu0 %747
      %vm749 = vcmask 392192
      %v750 = vsel %vm749, %v734, %v736
      %v751 = vsel %vm749, %v736, %v738
      %v752 = vsel %vm749, %v738, %v740
      %v753 = vsel %vm749, %v740, %v742
      %v754 = vsel %vm749, %v742, %v744
      %v755 = vsel %vm749, %v744, %v746
      %v756 = vsel %vm749, %v746, %v748
      %757 = vrot.lane.b32.xlu0 %v227, 47
      %v758 = vpop.permute.xlu0 %757
      %759 = vrot.lane.b32.xlu0 %v228, 47
      %v760 = vpop.permute.xlu0 %759
      %761 = vrot.lane.b32.xlu0 %v229, 47
      %v762 = vpop.permute.xlu0 %761
      %763 = vrot.lane.b32.xlu0 %v230, 47
      %v764 = vpop.permute.xlu0 %763
      %765 = vrot.lane.b32.xlu0 %v231, 47
      %v766 = vpop.permute.xlu0 %765
      %767 = vrot.lane.b32.xlu0 %v232, 47
      %v768 = vpop.permute.xlu0 %767
      %769 = vrot.lane.b32.xlu0 %v233, 47
      %v770 = vpop.permute.xlu0 %769
      %771 = vrot.lane.b32.xlu0 %v234, 47
      %v772 = vpop.permute.xlu0 %771
      %vm773 = vcmask 384000
      %v774 = vsel %vm773, %v758, %v760
      %v775 = vsel %vm773, %v760, %v762
      %v776 = vsel %vm773, %v762, %v764
      %v777 = vsel %vm773, %v764, %v766
      %v778 = vsel %vm773, %v766, %v768
      %v779 = vsel %vm773, %v768, %v770
      %v780 = vsel %vm773, %v770, %v772
      %781 = vrot.lane.b32.xlu0 %v227, 39
      %v782 = vpop.permute.xlu0 %781
      %783 = vrot.lane.b32.xlu0 %v228, 39
      %v784 = vpop.permute.xlu0 %783
      %785 = vrot.lane.b32.xlu0 %v229, 39
      %v786 = vpop.permute.xlu0 %785
      %787 = vrot.lane.b32.xlu0 %v230, 39
      %v788 = vpop.permute.xlu0 %787
      %789 = vrot.lane.b32.xlu0 %v231, 39
      %v790 = vpop.permute.xlu0 %789
      %791 = vrot.lane.b32.xlu0 %v232, 39
      %v792 = vpop.permute.xlu0 %791
      %793 = vrot.lane.b32.xlu0 %v233, 39
      %v794 = vpop.permute.xlu0 %793
      %795 = vrot.lane.b32.xlu0 %v234, 39
      %v796 = vpop.permute.xlu0 %795
      %vm797 = vcmask 318464
      %v798 = vsel %vm797, %v782, %v784
      %v799 = vsel %vm797, %v784, %v786
      %v800 = vsel %vm797, %v786, %v788
      %v801 = vsel %vm797, %v788, %v790
      %v802 = vsel %vm797, %v790, %v792
      %v803 = vsel %vm797, %v792, %v794
      %v804 = vsel %vm797, %v794, %v796
      %805 = vrot.lane.b32.xlu0 %v227, 38
      %v806 = vpop.permute.xlu0 %805
      %807 = vrot.lane.b32.xlu0 %v228, 38
      %v808 = vpop.permute.xlu0 %807
      %809 = vrot.lane.b32.xlu0 %v229, 38
      %v810 = vpop.permute.xlu0 %809
      %811 = vrot.lane.b32.xlu0 %v230, 38
      %v812 = vpop.permute.xlu0 %811
      %813 = vrot.lane.b32.xlu0 %v231, 38
      %v814 = vpop.permute.xlu0 %813
      %815 = vrot.lane.b32.xlu0 %v232, 38
      %v816 = vpop.permute.xlu0 %815
      %817 = vrot.lane.b32.xlu0 %v233, 38
      %v818 = vpop.permute.xlu0 %817
      %819 = vrot.lane.b32.xlu0 %v234, 38
      %v820 = vpop.permute.xlu0 %819
      %vm821 = vcmask 310272
      %v822 = vsel %vm821, %v806, %v808
      %v823 = vsel %vm821, %v808, %v810
      %v824 = vsel %vm821, %v810, %v812
      %v825 = vsel %vm821, %v812, %v814
      %v826 = vsel %vm821, %v814, %v816
      %v827 = vsel %vm821, %v816, %v818
      %v828 = vsel %vm821, %v818, %v820
      %829 = vrot.lane.b32.xlu0 %v227, 37
      %v830 = vpop.permute.xlu0 %829
      %831 = vrot.lane.b32.xlu0 %v228, 37
      %v832 = vpop.permute.xlu0 %831
      %833 = vrot.lane.b32.xlu0 %v229, 37
      %v834 = vpop.permute.xlu0 %833
      %835 = vrot.lane.b32.xlu0 %v230, 37
      %v836 = vpop.permute.xlu0 %835
      %837 = vrot.lane.b32.xlu0 %v231, 37
      %v838 = vpop.permute.xlu0 %837
      %839 = vrot.lane.b32.xlu0 %v232, 37
      %v840 = vpop.permute.xlu0 %839
      %841 = vrot.lane.b32.xlu0 %v233, 37
      %v842 = vpop.permute.xlu0 %841
      %843 = vrot.lane.b32.xlu0 %v234, 37
      %v844 = vpop.permute.xlu0 %843
      %vm845 = vcmask 302080
      %v846 = vsel %vm845, %v830, %v832
      %v847 = vsel %vm845, %v832, %v834
      %v848 = vsel %vm845, %v834, %v836
      %v849 = vsel %vm845, %v836, %v838
      %v850 = vsel %vm845, %v838, %v840
      %v851 = vsel %vm845, %v840, %v842
      %v852 = vsel %vm845, %v842, %v844
      %853 = vrot.lane.b32.xlu0 %v227, 29
      %v854 = vpop.permute.xlu0 %853
      %855 = vrot.lane.b32.xlu0 %v228, 29
      %v856 = vpop.permute.xlu0 %855
      %857 = vrot.lane.b32.xlu0 %v229, 29
      %v858 = vpop.permute.xlu0 %857
      %859 = vrot.lane.b32.xlu0 %v230, 29
      %v860 = vpop.permute.xlu0 %859
      %861 = vrot.lane.b32.xlu0 %v231, 29
      %v862 = vpop.permute.xlu0 %861
      %863 = vrot.lane.b32.xlu0 %v232, 29
      %v864 = vpop.permute.xlu0 %863
      %865 = vrot.lane.b32.xlu0 %v233, 29
      %v866 = vpop.permute.xlu0 %865
      %867 = vrot.lane.b32.xlu0 %v234, 29
      %v868 = vpop.permute.xlu0 %867
      %vm869 = vcmask 236544
      %v870 = vsel %vm869, %v854, %v856
      %v871 = vsel %vm869, %v856, %v858
      %v872 = vsel %vm869, %v858, %v860
      %v873 = vsel %vm869, %v860, %v862
      %v874 = vsel %vm869, %v862, %v864
      %v875 = vsel %vm869, %v864, %v866
      %v876 = vsel %vm869, %v866, %v868
      %877 = vrot.lane.b32.xlu0 %v234, 28
      %v878 = vpop.permute.xlu0 %877
      %v879 = vsel %vm507, %v506, %v878
      %880 = vrot.lane.b32.xlu0 %v234, 27
      %v881 = vpop.permute.xlu0 %880
      %v882 = vsel %vm538, %v537, %v881
      %883 = vrot.lane.b32.xlu0 %v226, 7
      %v884 = vpop.permute.xlu0 %883
      %885 = vrot.lane.b32.xlu0 %v227, 7
      %v886 = vpop.permute.xlu0 %885
      %887 = vrot.lane.b32.xlu0 %v228, 7
      %v888 = vpop.permute.xlu0 %887
      %889 = vrot.lane.b32.xlu0 %v229, 7
      %v890 = vpop.permute.xlu0 %889
      %891 = vrot.lane.b32.xlu0 %v230, 7
      %v892 = vpop.permute.xlu0 %891
      %893 = vrot.lane.b32.xlu0 %v231, 7
      %v894 = vpop.permute.xlu0 %893
      %895 = vrot.lane.b32.xlu0 %v232, 7
      %v896 = vpop.permute.xlu0 %895
      %897 = vrot.lane.b32.xlu0 %v233, 7
      %v898 = vpop.permute.xlu0 %897
      %899 = vrot.lane.b32.xlu0 %v260, 7
      %v900 = vpop.permute.xlu0 %899
      %901 = vrot.lane.b32.xlu0 %v261, 7
      %v902 = vpop.permute.xlu0 %901
      %903 = vrot.lane.b32.xlu0 %v262, 7
      %v904 = vpop.permute.xlu0 %903
      %905 = vrot.lane.b32.xlu0 %v263, 7
      %v906 = vpop.permute.xlu0 %905
      %907 = vrot.lane.b32.xlu0 %v264, 7
      %v908 = vpop.permute.xlu0 %907
      %909 = vrot.lane.b32.xlu0 %v265, 7
      %v910 = vpop.permute.xlu0 %909
      %911 = vrot.lane.b32.xlu0 %v266, 7
      %v912 = vpop.permute.xlu0 %911
      %913 = vrot.lane.b32.xlu0 %v258, 7
      %v914 = vpop.permute.xlu0 %913
      %915 = vrot.lane.b32.xlu0 %v710, 7
      %v916 = vpop.permute.xlu0 %915
      %917 = vrot.lane.b32.xlu0 %v726, 7
      %v918 = vpop.permute.xlu0 %917
      %919 = vrot.lane.b32.xlu0 %v727, 7
      %v920 = vpop.permute.xlu0 %919
      %921 = vrot.lane.b32.xlu0 %v728, 7
      %v922 = vpop.permute.xlu0 %921
      %923 = vrot.lane.b32.xlu0 %v729, 7
      %v924 = vpop.permute.xlu0 %923
      %925 = vrot.lane.b32.xlu0 %v730, 7
      %v926 = vpop.permute.xlu0 %925
      %927 = vrot.lane.b32.xlu0 %v731, 7
      %v928 = vpop.permute.xlu0 %927
      %929 = vrot.lane.b32.xlu0 %v732, 7
      %v930 = vpop.permute.xlu0 %929
      %931 = vrot.lane.b32.xlu0 %v734, 7
      %v932 = vpop.permute.xlu0 %931
      %933 = vrot.lane.b32.xlu0 %v750, 7
      %v934 = vpop.permute.xlu0 %933
      %935 = vrot.lane.b32.xlu0 %v751, 7
      %v936 = vpop.permute.xlu0 %935
      %937 = vrot.lane.b32.xlu0 %v752, 7
      %v938 = vpop.permute.xlu0 %937
      %939 = vrot.lane.b32.xlu0 %v753, 7
      %v940 = vpop.permute.xlu0 %939
      %941 = vrot.lane.b32.xlu0 %v754, 7
      %v942 = vpop.permute.xlu0 %941
      %943 = vrot.lane.b32.xlu0 %v755, 7
      %v944 = vpop.permute.xlu0 %943
      %945 = vrot.lane.b32.xlu0 %v756, 7
      %v946 = vpop.permute.xlu0 %945
      %947 = vrot.lane.b32.xlu0 %v758, 7
      %v948 = vpop.permute.xlu0 %947
      %949 = vrot.lane.b32.xlu0 %v774, 7
      %v950 = vpop.permute.xlu0 %949
      %951 = vrot.lane.b32.xlu0 %v775, 7
      %v952 = vpop.permute.xlu0 %951
      %953 = vrot.lane.b32.xlu0 %v776, 7
      %v954 = vpop.permute.xlu0 %953
      %955 = vrot.lane.b32.xlu0 %v777, 7
      %v956 = vpop.permute.xlu0 %955
      %957 = vrot.lane.b32.xlu0 %v778, 7
      %v958 = vpop.permute.xlu0 %957
      %959 = vrot.lane.b32.xlu0 %v779, 7
      %v960 = vpop.permute.xlu0 %959
      %961 = vrot.lane.b32.xlu0 %v780, 7
      %v962 = vpop.permute.xlu0 %961
      %963 = vrot.lane.b32.xlu0 %v782, 7
      %v964 = vpop.permute.xlu0 %963
      %965 = vrot.lane.b32.xlu0 %v798, 7
      %v966 = vpop.permute.xlu0 %965
      %967 = vrot.lane.b32.xlu0 %v799, 7
      %v968 = vpop.permute.xlu0 %967
      %969 = vrot.lane.b32.xlu0 %v800, 7
      %v970 = vpop.permute.xlu0 %969
      %971 = vrot.lane.b32.xlu0 %v801, 7
      %v972 = vpop.permute.xlu0 %971
      %973 = vrot.lane.b32.xlu0 %v802, 7
      %v974 = vpop.permute.xlu0 %973
      %975 = vrot.lane.b32.xlu0 %v803, 7
      %v976 = vpop.permute.xlu0 %975
      %977 = vrot.lane.b32.xlu0 %v804, 7
      %v978 = vpop.permute.xlu0 %977
      %979 = vrot.lane.b32.xlu0 %v806, 7
      %v980 = vpop.permute.xlu0 %979
      %981 = vrot.lane.b32.xlu0 %v822, 7
      %v982 = vpop.permute.xlu0 %981
      %983 = vrot.lane.b32.xlu0 %v823, 7
      %v984 = vpop.permute.xlu0 %983
      %985 = vrot.lane.b32.xlu0 %v824, 7
      %v986 = vpop.permute.xlu0 %985
      %987 = vrot.lane.b32.xlu0 %v825, 7
      %v988 = vpop.permute.xlu0 %987
      %989 = vrot.lane.b32.xlu0 %v826, 7
      %v990 = vpop.permute.xlu0 %989
      %991 = vrot.lane.b32.xlu0 %v827, 7
      %v992 = vpop.permute.xlu0 %991
      %993 = vrot.lane.b32.xlu0 %v828, 7
      %v994 = vpop.permute.xlu0 %993
      %995 = vrot.lane.b32.xlu0 %v830, 7
      %v996 = vpop.permute.xlu0 %995
      %997 = vrot.lane.b32.xlu0 %v846, 7
      %v998 = vpop.permute.xlu0 %997
      %999 = vrot.lane.b32.xlu0 %v847, 7
      %v1000 = vpop.permute.xlu0 %999
      %1001 = vrot.lane.b32.xlu0 %v848, 7
      %v1002 = vpop.permute.xlu0 %1001
      %1003 = vrot.lane.b32.xlu0 %v849, 7
      %v1004 = vpop.permute.xlu0 %1003
      %1005 = vrot.lane.b32.xlu0 %v850, 7
      %v1006 = vpop.permute.xlu0 %1005
      %1007 = vrot.lane.b32.xlu0 %v851, 7
      %v1008 = vpop.permute.xlu0 %1007
      %1009 = vrot.lane.b32.xlu0 %v852, 7
      %v1010 = vpop.permute.xlu0 %1009
      %1011 = vrot.lane.b32.xlu0 %v854, 7
      %v1012 = vpop.permute.xlu0 %1011
      %1013 = vrot.lane.b32.xlu0 %v870, 7
      %v1014 = vpop.permute.xlu0 %1013
      %1015 = vrot.lane.b32.xlu0 %v871, 7
      %v1016 = vpop.permute.xlu0 %1015
      %1017 = vrot.lane.b32.xlu0 %v872, 7
      %v1018 = vpop.permute.xlu0 %1017
      %1019 = vrot.lane.b32.xlu0 %v873, 7
      %v1020 = vpop.permute.xlu0 %1019
      %1021 = vrot.lane.b32.xlu0 %v874, 7
      %v1022 = vpop.permute.xlu0 %1021
      %1023 = vrot.lane.b32.xlu0 %v875, 7
      %v1024 = vpop.permute.xlu0 %1023
      %1025 = vrot.lane.b32.xlu0 %v876, 7
      %v1026 = vpop.permute.xlu0 %1025
      %1027 = vrot.lane.b32.xlu0 %v494, 7
      %v1028 = vpop.permute.xlu0 %1027
      %1029 = vrot.lane.b32.xlu0 %v509, 7
      %v1030 = vpop.permute.xlu0 %1029
      %1031 = vrot.lane.b32.xlu0 %v510, 7
      %v1032 = vpop.permute.xlu0 %1031
      %1033 = vrot.lane.b32.xlu0 %v511, 7
      %v1034 = vpop.permute.xlu0 %1033
      %1035 = vrot.lane.b32.xlu0 %v512, 7
      %v1036 = vpop.permute.xlu0 %1035
      %1037 = vrot.lane.b32.xlu0 %v513, 7
      %v1038 = vpop.permute.xlu0 %1037
      %1039 = vrot.lane.b32.xlu0 %v514, 7
      %v1040 = vpop.permute.xlu0 %1039
      %1041 = vrot.lane.b32.xlu0 %v879, 7
      %v1042 = vpop.permute.xlu0 %1041
      %1043 = vrot.lane.b32.xlu0 %v525, 7
      %v1044 = vpop.permute.xlu0 %1043
      %1045 = vrot.lane.b32.xlu0 %v540, 7
      %v1046 = vpop.permute.xlu0 %1045
      %1047 = vrot.lane.b32.xlu0 %v541, 7
      %v1048 = vpop.permute.xlu0 %1047
      %1049 = vrot.lane.b32.xlu0 %v542, 7
      %v1050 = vpop.permute.xlu0 %1049
      %1051 = vrot.lane.b32.xlu0 %v543, 7
      %v1052 = vpop.permute.xlu0 %1051
      %1053 = vrot.lane.b32.xlu0 %v544, 7
      %v1054 = vpop.permute.xlu0 %1053
      %1055 = vrot.lane.b32.xlu0 %v545, 7
      %v1056 = vpop.permute.xlu0 %1055
      %1057 = vrot.lane.b32.xlu0 %v882, 7
      %v1058 = vpop.permute.xlu0 %1057
      %vm1059 = vcmask 56320
      %v1060 = vsel %vm1059, %v884, %v886
      %v1061 = vsel %vm1059, %v886, %v888
      %v1062 = vsel %vm1059, %v888, %v890
      %v1063 = vsel %vm1059, %v890, %v892
      %v1064 = vsel %vm1059, %v892, %v894
      %v1065 = vsel %vm1059, %v894, %v896
      %v1066 = vsel %vm1059, %v896, %v898
      %v1067 = vsel %vm1059, %v900, %v902
      %v1068 = vsel %vm1059, %v902, %v904
      %v1069 = vsel %vm1059, %v904, %v906
      %v1070 = vsel %vm1059, %v906, %v908
      %v1071 = vsel %vm1059, %v908, %v910
      %v1072 = vsel %vm1059, %v910, %v912
      %v1073 = vsel %vm1059, %v912, %v914
      %v1074 = vsel %vm1059, %v916, %v918
      %v1075 = vsel %vm1059, %v918, %v920
      %v1076 = vsel %vm1059, %v920, %v922
      %v1077 = vsel %vm1059, %v922, %v924
      %v1078 = vsel %vm1059, %v924, %v926
      %v1079 = vsel %vm1059, %v926, %v928
      %v1080 = vsel %vm1059, %v928, %v930
      %v1081 = vsel %vm1059, %v932, %v934
      %v1082 = vsel %vm1059, %v934, %v936
      %v1083 = vsel %vm1059, %v936, %v938
      %v1084 = vsel %vm1059, %v938, %v940
      %v1085 = vsel %vm1059, %v940, %v942
      %v1086 = vsel %vm1059, %v942, %v944
      %v1087 = vsel %vm1059, %v944, %v946
      %v1088 = vsel %vm1059, %v948, %v950
      %v1089 = vsel %vm1059, %v950, %v952
      %v1090 = vsel %vm1059, %v952, %v954
      %v1091 = vsel %vm1059, %v954, %v956
      %v1092 = vsel %vm1059, %v956, %v958
      %v1093 = vsel %vm1059, %v958, %v960
      %v1094 = vsel %vm1059, %v960, %v962
      %v1095 = vsel %vm1059, %v964, %v966
      %v1096 = vsel %vm1059, %v966, %v968
      %v1097 = vsel %vm1059, %v968, %v970
      %v1098 = vsel %vm1059, %v970, %v972
      %v1099 = vsel %vm1059, %v972, %v974
      %v1100 = vsel %vm1059, %v974, %v976
      %v1101 = vsel %vm1059, %v976, %v978
      %v1102 = vsel %vm1059, %v980, %v982
      %v1103 = vsel %vm1059, %v982, %v984
      %v1104 = vsel %vm1059, %v984, %v986
      %v1105 = vsel %vm1059, %v986, %v988
      %v1106 = vsel %vm1059, %v988, %v990
      %v1107 = vsel %vm1059, %v990, %v992
      %v1108 = vsel %vm1059, %v992, %v994
      %v1109 = vsel %vm1059, %v996, %v998
      %v1110 = vsel %vm1059, %v998, %v1000
      %v1111 = vsel %vm1059, %v1000, %v1002
      %v1112 = vsel %vm1059, %v1002, %v1004
      %v1113 = vsel %vm1059, %v1004, %v1006
      %v1114 = vsel %vm1059, %v1006, %v1008
      %v1115 = vsel %vm1059, %v1008, %v1010
      %v1116 = vsel %vm1059, %v1012, %v1014
      %v1117 = vsel %vm1059, %v1014, %v1016
      %v1118 = vsel %vm1059, %v1016, %v1018
      %v1119 = vsel %vm1059, %v1018, %v1020
      %v1120 = vsel %vm1059, %v1020, %v1022
      %v1121 = vsel %vm1059, %v1022, %v1024
      %v1122 = vsel %vm1059, %v1024, %v1026
      %v1123 = vsel %vm1059, %v1028, %v1030
      %v1124 = vsel %vm1059, %v1030, %v1032
      %v1125 = vsel %vm1059, %v1032, %v1034
      %v1126 = vsel %vm1059, %v1034, %v1036
      %v1127 = vsel %vm1059, %v1036, %v1038
      %v1128 = vsel %vm1059, %v1038, %v1040
      %v1129 = vsel %vm1059, %v1040, %v1042
      %v1130 = vsel %vm1059, %v1044, %v1046
      %v1131 = vsel %vm1059, %v1046, %v1048
      %v1132 = vsel %vm1059, %v1048, %v1050
      %v1133 = vsel %vm1059, %v1050, %v1052
      %v1134 = vsel %vm1059, %v1052, %v1054
      %v1135 = vsel %vm1059, %v1054, %v1056
      %v1136 = vsel %vm1059, %v1056, %v1058
      %v1214 = vpack.c.bf16 %v260, %v226
      %v1215 = vpack.c.bf16 %v261, %v227
      %v1216 = vpack.c.bf16 %v262, %v228
      %v1217 = vpack.c.bf16 %v263, %v229
      %v1218 = vpack.c.bf16 %v264, %v230
      %v1219 = vpack.c.bf16 %v265, %v231
      %v1220 = vpack.c.bf16 %v266, %v232
      %v1221 = vpack.c.bf16 %v322, %v291
      %v1222 = vpack.c.bf16 %v323, %v292
      %v1223 = vpack.c.bf16 %v324, %v293
      %v1224 = vpack.c.bf16 %v325, %v294
      %v1225 = vpack.c.bf16 %v326, %v295
      %v1226 = vpack.c.bf16 %v327, %v296
      %v1227 = vpack.c.bf16 %v328, %v297
      %v1228 = vpack.c.bf16 %v384, %v353
      %v1229 = vpack.c.bf16 %v385, %v354
      %v1230 = vpack.c.bf16 %v386, %v355
      %v1231 = vpack.c.bf16 %v387, %v356
      %v1232 = vpack.c.bf16 %v388, %v357
      %v1233 = vpack.c.bf16 %v389, %v358
      %v1234 = vpack.c.bf16 %v390, %v359
      %v1235 = vpack.c.bf16 %v446, %v415
      %v1236 = vpack.c.bf16 %v447, %v416
      %v1237 = vpack.c.bf16 %v448, %v417
      %v1238 = vpack.c.bf16 %v449, %v418
      %v1239 = vpack.c.bf16 %v450, %v419
      %v1240 = vpack.c.bf16 %v451, %v420
      %v1241 = vpack.c.bf16 %v452, %v421
      %v1242 = vpack.c.bf16 %v508, %v477
      %v1243 = vpack.c.bf16 %v509, %v478
      %v1244 = vpack.c.bf16 %v510, %v479
      %v1245 = vpack.c.bf16 %v511, %v480
      %v1246 = vpack.c.bf16 %v512, %v481
      %v1247 = vpack.c.bf16 %v513, %v482
      %v1248 = vpack.c.bf16 %v514, %v483
      %v1249 = vpack.c.bf16 %v570, %v539
      %v1250 = vpack.c.bf16 %v571, %v540
      %v1251 = vpack.c.bf16 %v572, %v541
      %v1252 = vpack.c.bf16 %v573, %v542
      %v1253 = vpack.c.bf16 %v574, %v543
      %v1254 = vpack.c.bf16 %v575, %v544
      %v1255 = vpack.c.bf16 %v576, %v545
      %v1256 = vpack.c.bf16 %v632, %v601
      %v1257 = vpack.c.bf16 %v633, %v602
      %v1258 = vpack.c.bf16 %v634, %v603
      %v1259 = vpack.c.bf16 %v635, %v604
      %v1260 = vpack.c.bf16 %v636, %v605
      %v1261 = vpack.c.bf16 %v637, %v606
      %v1262 = vpack.c.bf16 %v638, %v607
      %v1263 = vpack.c.bf16 %v694, %v663
      %v1264 = vpack.c.bf16 %v695, %v664
      %v1265 = vpack.c.bf16 %v696, %v665
      %v1266 = vpack.c.bf16 %v697, %v666
      %v1267 = vpack.c.bf16 %v698, %v667
      %v1268 = vpack.c.bf16 %v699, %v668
      %v1269 = vpack.c.bf16 %v700, %v669
      %v1270 = vpack.c.bf16 %v1067, %v1060
      %v1271 = vpack.c.bf16 %v1068, %v1061
      %v1272 = vpack.c.bf16 %v1069, %v1062
      %v1273 = vpack.c.bf16 %v1070, %v1063
      %v1274 = vpack.c.bf16 %v1071, %v1064
      %v1275 = vpack.c.bf16 %v1072, %v1065
      %v1276 = vpack.c.bf16 %v1073, %v1066
      %v1277 = vpack.c.bf16 %v1081, %v1074
      %v1278 = vpack.c.bf16 %v1082, %v1075
      %v1279 = vpack.c.bf16 %v1083, %v1076
      %v1280 = vpack.c.bf16 %v1084, %v1077
      %v1281 = vpack.c.bf16 %v1085, %v1078
      %v1282 = vpack.c.bf16 %v1086, %v1079
      %v1283 = vpack.c.bf16 %v1087, %v1080
      %v1284 = vpack.c.bf16 %v1095, %v1088
      %v1285 = vpack.c.bf16 %v1096, %v1089
      %v1286 = vpack.c.bf16 %v1097, %v1090
      %v1287 = vpack.c.bf16 %v1098, %v1091
      %v1288 = vpack.c.bf16 %v1099, %v1092
      %v1289 = vpack.c.bf16 %v1100, %v1093
      %v1290 = vpack.c.bf16 %v1101, %v1094
      %v1291 = vpack.c.bf16 %v1109, %v1102
      %v1292 = vpack.c.bf16 %v1110, %v1103
      %v1293 = vpack.c.bf16 %v1111, %v1104
      %v1294 = vpack.c.bf16 %v1112, %v1105
      %v1295 = vpack.c.bf16 %v1113, %v1106
      %v1296 = vpack.c.bf16 %v1114, %v1107
      %v1297 = vpack.c.bf16 %v1115, %v1108
      %v1298 = vpack.c.bf16 %v1123, %v1116
      %v1299 = vpack.c.bf16 %v1124, %v1117
      %v1300 = vpack.c.bf16 %v1125, %v1118
      %v1301 = vpack.c.bf16 %v1126, %v1119
      %v1302 = vpack.c.bf16 %v1127, %v1120
      %v1303 = vpack.c.bf16 %v1128, %v1121
      %v1304 = vpack.c.bf16 %v1129, %v1122
      %v1305 = vpack.c.bf16 %v1130, %v1130
      %v1306 = vpack.c.bf16 %v1131, %v1131
      %v1307 = vpack.c.bf16 %v1132, %v1132
      %v1308 = vpack.c.bf16 %v1133, %v1133
      %v1309 = vpack.c.bf16 %v1134, %v1134
      %v1310 = vpack.c.bf16 %v1135, %v1135
      %v1311 = vpack.c.bf16 %v1136, %v1136
      %v1312 = vld [vmem:[%s1] sm:$0xf]
      %1314 = vst [vmem:[#allocation1] ss:$4 sm:$0xff] %v1312
      %v1315 = vld.sshfl [vmem:[#allocation1] sm:$0xff pattern:$0x73625140]
      %v1316 = vld.sshfl [vmem:[#allocation1 + $0x8] sm:$0xff pattern:$0x73625140]
      %vm1318 = vcmask 719872
      %v1319 = vsel %vm1318, %v1316, 0
      %vm1321 = vcmask 1043456
      %v1323 = vsel %vm1321, %v1305, 0
      %v1326 = vsel %vm1321, %v1306, 0
      %v1329 = vsel %vm1321, %v1307, 0
      %v1332 = vsel %vm1321, %v1308, 0
      %v1335 = vsel %vm1321, %v1309, 0
      %v1338 = vsel %vm1321, %v1310, 0
      %v1341 = vsel %vm1321, %v1311, 0
      %1343 = vmatpush.bf16.msra.mxu0 %v1263
      %1344 = vmatpush.bf16.msra.mxu0 %v1256
      %1345 = vmatpush.bf16.msra.mxu0 %v1249
      %1346 = vmatpush.bf16.msra.mxu0 %v1242
      %1347 = vmatpush.bf16.msra.mxu0 %v1235
      %1348 = vmatpush.bf16.msra.mxu0 %v1228
      %1349 = vmatpush.bf16.msra.mxu0 %v1221
      %1350 = vmatpush.bf16.msra.mxu0 %v1214
      %1351 = vmatmul.bf16.gmra.mxu0 %v1315
      %v1352 = vpop.f32.mrf.mxu0
      %v1353 = vadd.f32 0.0, %v1352
      %v1354 = vpop.f32.mrf.mxu0
      %1355 = vdwg.mxu0
      %1356 = vmatpush.bf16.msra.mxu0 0
      %1357 = vmatpush.bf16.msra.mxu0 0
      %1358 = vmatpush.bf16.msra.mxu0 %v1323
      %1359 = vmatpush.bf16.msra.mxu0 %v1298
      %1360 = vmatpush.bf16.msra.mxu0 %v1291
      %1361 = vmatpush.bf16.msra.mxu0 %v1284
      %1362 = vmatpush.bf16.msra.mxu0 %v1277
      %1363 = vmatpush.bf16.msra.mxu0 %v1270
      %1364 = vmatmul.bf16.gmra.mxu0 %v1319
      %v1365 = vpop.f32.mrf.mxu0
      %v1366 = vadd.f32 %v1353, %v1365
      %v1367 = vpop.f32.mrf.mxu0
      %1368 = vdwg.mxu0
      %1369 = vmatpush.bf16.msra.mxu0 %v1264
      %1370 = vmatpush.bf16.msra.mxu0 %v1257
      %1371 = vmatpush.bf16.msra.mxu0 %v1250
      %1372 = vmatpush.bf16.msra.mxu0 %v1243
      %1373 = vmatpush.bf16.msra.mxu0 %v1236
      %1374 = vmatpush.bf16.msra.mxu0 %v1229
      %1375 = vmatpush.bf16.msra.mxu0 %v1222
      %1376 = vmatpush.bf16.msra.mxu0 %v1215
      %1377 = vmatmul.bf16.gmra.mxu0 %v1315
      %v1378 = vpop.f32.mrf.mxu0
      %v1379 = vadd.f32 0.0, %v1378
      %v1380 = vpop.f32.mrf.mxu0
      %1381 = vdwg.mxu0
      %1382 = vmatpush.bf16.msra.mxu0 0
      %1383 = vmatpush.bf16.msra.mxu0 0
      %1384 = vmatpush.bf16.msra.mxu0 %v1326
      %1385 = vmatpush.bf16.msra.mxu0 %v1299
      %1386 = vmatpush.bf16.msra.mxu0 %v1292
      %1387 = vmatpush.bf16.msra.mxu0 %v1285
      %1388 = vmatpush.bf16.msra.mxu0 %v1278
      %1389 = vmatpush.bf16.msra.mxu0 %v1271
      %1390 = vmatmul.bf16.gmra.mxu0 %v1319
      %v1391 = vpop.f32.mrf.mxu0
      %v1392 = vadd.f32 %v1379, %v1391
      %v1393 = vpop.f32.mrf.mxu0
      %1394 = vdwg.mxu0
      %1395 = vmatpush.bf16.msra.mxu0 %v1265
      %1396 = vmatpush.bf16.msra.mxu0 %v1258
      %1397 = vmatpush.bf16.msra.mxu0 %v1251
      %1398 = vmatpush.bf16.msra.mxu0 %v1244
      %1399 = vmatpush.bf16.msra.mxu0 %v1237
      %1400 = vmatpush.bf16.msra.mxu0 %v1230
      %1401 = vmatpush.bf16.msra.mxu0 %v1223
      %1402 = vmatpush.bf16.msra.mxu0 %v1216
      %1403 = vmatmul.bf16.gmra.mxu0 %v1315
      %v1404 = vpop.f32.mrf.mxu0
      %v1405 = vadd.f32 0.0, %v1404
      %v1406 = vpop.f32.mrf.mxu0
      %1407 = vdwg.mxu0
      %1408 = vmatpush.bf16.msra.mxu0 0
      %1409 = vmatpush.bf16.msra.mxu0 0
      %1410 = vmatpush.bf16.msra.mxu0 %v1329
      %1411 = vmatpush.bf16.msra.mxu0 %v1300
      %1412 = vmatpush.bf16.msra.mxu0 %v1293
      %1413 = vmatpush.bf16.msra.mxu0 %v1286
      %1414 = vmatpush.bf16.msra.mxu0 %v1279
      %1415 = vmatpush.bf16.msra.mxu0 %v1272
      %1416 = vmatmul.bf16.gmra.mxu0 %v1319
      %v1417 = vpop.f32.mrf.mxu0
      %v1418 = vadd.f32 %v1405, %v1417
      %v1419 = vpop.f32.mrf.mxu0
      %1420 = vdwg.mxu0
      %1421 = vmatpush.bf16.msra.mxu0 %v1266
      %1422 = vmatpush.bf16.msra.mxu0 %v1259
      %1423 = vmatpush.bf16.msra.mxu0 %v1252
      %1424 = vmatpush.bf16.msra.mxu0 %v1245
      %1425 = vmatpush.bf16.msra.mxu0 %v1238
      %1426 = vmatpush.bf16.msra.mxu0 %v1231
      %1427 = vmatpush.bf16.msra.mxu0 %v1224
      %1428 = vmatpush.bf16.msra.mxu0 %v1217
      %1429 = vmatmul.bf16.gmra.mxu0 %v1315
      %v1430 = vpop.f32.mrf.mxu0
      %v1431 = vadd.f32 0.0, %v1430
      %v1432 = vpop.f32.mrf.mxu0
      %1433 = vdwg.mxu0
      %1434 = vmatpush.bf16.msra.mxu0 0
      %1435 = vmatpush.bf16.msra.mxu0 0
      %1436 = vmatpush.bf16.msra.mxu0 %v1332
      %1437 = vmatpush.bf16.msra.mxu0 %v1301
      %1438 = vmatpush.bf16.msra.mxu0 %v1294
      %1439 = vmatpush.bf16.msra.mxu0 %v1287
      %1440 = vmatpush.bf16.msra.mxu0 %v1280
      %1441 = vmatpush.bf16.msra.mxu0 %v1273
      %1442 = vmatmul.bf16.gmra.mxu0 %v1319
      %v1443 = vpop.f32.mrf.mxu0
      %v1444 = vadd.f32 %v1431, %v1443
      %v1445 = vpop.f32.mrf.mxu0
      %1446 = vdwg.mxu0
      %1447 = vmatpush.bf16.msra.mxu0 %v1267
      %1448 = vmatpush.bf16.msra.mxu0 %v1260
      %1449 = vmatpush.bf16.msra.mxu0 %v1253
      %1450 = vmatpush.bf16.msra.mxu0 %v1246
      %1451 = vmatpush.bf16.msra.mxu0 %v1239
      %1452 = vmatpush.bf16.msra.mxu0 %v1232
      %1453 = vmatpush.bf16.msra.mxu0 %v1225
      %1454 = vmatpush.bf16.msra.mxu0 %v1218
      %1455 = vmatmul.bf16.gmra.mxu0 %v1315
      %v1456 = vpop.f32.mrf.mxu0
      %v1457 = vadd.f32 0.0, %v1456
      %v1458 = vpop.f32.mrf.mxu0
      %1459 = vdwg.mxu0
      %1460 = vmatpush.bf16.msra.mxu0 0
      %1461 = vmatpush.bf16.msra.mxu0 0
      %1462 = vmatpush.bf16.msra.mxu0 %v1335
      %1463 = vmatpush.bf16.msra.mxu0 %v1302
      %1464 = vmatpush.bf16.msra.mxu0 %v1295
      %1465 = vmatpush.bf16.msra.mxu0 %v1288
      %1466 = vmatpush.bf16.msra.mxu0 %v1281
      %1467 = vmatpush.bf16.msra.mxu0 %v1274
      %1468 = vmatmul.bf16.gmra.mxu0 %v1319
      %v1469 = vpop.f32.mrf.mxu0
      %v1470 = vadd.f32 %v1457, %v1469
      %v1471 = vpop.f32.mrf.mxu0
      %1472 = vdwg.mxu0
      %1473 = vmatpush.bf16.msra.mxu0 %v1268
      %1474 = vmatpush.bf16.msra.mxu0 %v1261
      %1475 = vmatpush.bf16.msra.mxu0 %v1254
      %1476 = vmatpush.bf16.msra.mxu0 %v1247
      %1477 = vmatpush.bf16.msra.mxu0 %v1240
      %1478 = vmatpush.bf16.msra.mxu0 %v1233
      %1479 = vmatpush.bf16.msra.mxu0 %v1226
      %1480 = vmatpush.bf16.msra.mxu0 %v1219
      %1481 = vmatmul.bf16.gmra.mxu0 %v1315
      %v1482 = vpop.f32.mrf.mxu0
      %v1483 = vadd.f32 0.0, %v1482
      %v1484 = vpop.f32.mrf.mxu0
      %1485 = vdwg.mxu0
      %1486 = vmatpush.bf16.msra.mxu0 0
      %1487 = vmatpush.bf16.msra.mxu0 0
      %1488 = vmatpush.bf16.msra.mxu0 %v1338
      %1489 = vmatpush.bf16.msra.mxu0 %v1303
      %1490 = vmatpush.bf16.msra.mxu0 %v1296
      %1491 = vmatpush.bf16.msra.mxu0 %v1289
      %1492 = vmatpush.bf16.msra.mxu0 %v1282
      %1493 = vmatpush.bf16.msra.mxu0 %v1275
      %1494 = vmatmul.bf16.gmra.mxu0 %v1319
      %v1495 = vpop.f32.mrf.mxu0
      %v1496 = vadd.f32 %v1483, %v1495
      %v1497 = vpop.f32.mrf.mxu0
      %1498 = vdwg.mxu0
      %1499 = vmatpush.bf16.msra.mxu0 %v1269
      %1500 = vmatpush.bf16.msra.mxu0 %v1262
      %1501 = vmatpush.bf16.msra.mxu0 %v1255
      %1502 = vmatpush.bf16.msra.mxu0 %v1248
      %1503 = vmatpush.bf16.msra.mxu0 %v1241
      %1504 = vmatpush.bf16.msra.mxu0 %v1234
      %1505 = vmatpush.bf16.msra.mxu0 %v1227
      %1506 = vmatpush.bf16.msra.mxu0 %v1220
      %1507 = vmatmul.bf16.gmra.mxu0 %v1315
      %v1508 = vpop.f32.mrf.mxu0
      %v1509 = vadd.f32 0.0, %v1508
      %v1510 = vpop.f32.mrf.mxu0
      %1511 = vdwg.mxu0
      %1512 = vmatpush.bf16.msra.mxu0 0
      %1513 = vmatpush.bf16.msra.mxu0 0
      %1514 = vmatpush.bf16.msra.mxu0 %v1341
      %1515 = vmatpush.bf16.msra.mxu0 %v1304
      %1516 = vmatpush.bf16.msra.mxu0 %v1297
      %1517 = vmatpush.bf16.msra.mxu0 %v1290
      %1518 = vmatpush.bf16.msra.mxu0 %v1283
      %1519 = vmatpush.bf16.msra.mxu0 %v1276
      %1520 = vmatmul.bf16.gmra.mxu0 %v1319
      %v1521 = vpop.f32.mrf.mxu0
      %v1522 = vadd.f32 %v1509, %v1521
      %v1523 = vpop.f32.mrf.mxu0
      %1524 = vdwg.mxu0
      %v1531 = vrot.slane %v1392, 4
      %v1532 = vrot.slane %v1444, 4
      %v1533 = vrot.slane %v1496, 4
      %v1534 = vsel %vm1321, %v1366, %v1531
      %v1535 = vsel %vm1321, %v1418, %v1532
      %v1536 = vsel %vm1321, %v1470, %v1533
      %1540 = vst [vmem:[%s219] sm:$0xff] %v1534
      %1541 = vst [vmem:[%s219 + $0x8] sm:$0xff] %v1535
      %1542 = vst [vmem:[%s219 + $0x10] sm:$0xff] %v1536
      %1543 = vst [vmem:[%s219 + $0x18] sm:$0xf] %v1522
      %p1544 = scmp.eq.s32.totalorder %s17, 0
      // Predicated region
      $region33: #{up3d_forward.10} parent=31 // pred_check
        %p1545 = pneg %p1544
      $region34: #{up3d_forward.10} parent=31 // pred_check_branch
        %1547 = sbr.rel (%p1545) target = $region36
      $region35: #{up3d_forward.10} parent=31 // pred_region
        %vm1548 = vcmask 3072
        %1549 = vst.msk [vmem:[#allocation2] sm:$0xf] %vm1548, 0.0
        %1550 = vst.msk [vmem:[#allocation3] sm:$0xf] %vm1548, 0.0
      $region36: #{up3d_forward.10} parent=31 // pred_fallthru
        _
      %v1551 = vld [vmem:[%s2] sm:$0xff]
      %v1553 = vperm.slane %v1551, 0
      %v1554 = vperm.slane %v1551, 1
      %v1555 = vperm.slane %v1551, 2
      %v1556 = vperm.slane %v1551, 3
      %v1557 = vperm.slane %v1551, 4
      %v1558 = vperm.slane %v1551, 5
      %v1559 = vperm.slane %v1551, 6
      %v1567 = vmul.f32 %v1366, %v1553
      %v1568 = vmul.f32 %v1392, %v1554
      %v1569 = vmul.f32 %v1418, %v1555
      %v1570 = vmul.f32 %v1444, %v1556
      %v1571 = vmul.f32 %v1470, %v1557
      %v1572 = vmul.f32 %v1496, %v1558
      %v1573 = vmul.f32 %v1522, %v1559
      %v1574 = vld [vmem:[#allocation2] sm:$0xf]
      %v1575 = vsel %vm1321, %v1567, 0.0
      %v1576 = vsel %vm1321, %v1568, 0.0
      %v1577 = vadd.f32 %v1575, %v1576
      %v1578 = vsel %vm1321, %v1569, 0.0
      %v1579 = vadd.f32 %v1577, %v1578
      %v1580 = vsel %vm1321, %v1570, 0.0
      %v1581 = vadd.f32 %v1579, %v1580
      %v1582 = vsel %vm1321, %v1571, 0.0
      %v1583 = vadd.f32 %v1581, %v1582
      %v1584 = vsel %vm1321, %v1572, 0.0
      %v1585 = vadd.f32 %v1583, %v1584
      %v1586 = vsel %vm1321, %v1573, 0.0
      %v1587 = vadd.f32 %v1585, %v1586
      %1588 = vadd.xlane.f32.xlu0 %v1587
      %v1589 = vpop.xlane.xlu0 %1588
      %v1590 = vadd.f32 %v1574, %v1589
      %vm1591 = vcmask 3072
      %1592 = vst.msk [vmem:[#allocation2] sm:$0xf] %vm1591, %v1590
      %v1593 = vld [vmem:[#allocation3] sm:$0xf]
      %v1594 = vmul.f32 %v1567, %v1366
      %v1595 = vmul.f32 %v1568, %v1392
      %v1596 = vmul.f32 %v1569, %v1418
      %v1597 = vmul.f32 %v1570, %v1444
      %v1598 = vmul.f32 %v1571, %v1470
      %v1599 = vmul.f32 %v1572, %v1496
      %v1600 = vmul.f32 %v1573, %v1522
      %v1601 = vsel %vm1321, %v1594, 0.0
      %v1602 = vsel %vm1321, %v1595, 0.0
      %v1603 = vadd.f32 %v1601, %v1602
      %v1604 = vsel %vm1321, %v1596, 0.0
      %v1605 = vadd.f32 %v1603, %v1604
      %v1606 = vsel %vm1321, %v1597, 0.0
      %v1607 = vadd.f32 %v1605, %v1606
      %v1608 = vsel %vm1321, %v1598, 0.0
      %v1609 = vadd.f32 %v1607, %v1608
      %v1610 = vsel %vm1321, %v1599, 0.0
      %v1611 = vadd.f32 %v1609, %v1610
      %v1612 = vsel %vm1321, %v1600, 0.0
      %v1613 = vadd.f32 %v1611, %v1612
      %1614 = vadd.xlane.f32.xlu0 %v1613
      %v1615 = vpop.xlane.xlu0 %1614
      %v1616 = vadd.f32 %v1593, %v1615
      %1617 = vst.msk [vmem:[#allocation3] sm:$0xf] %vm1591, %v1616
      %p1618 = scmp.eq.s32.totalorder %s17, 1
      // Predicated region
      $region37: #{up3d_forward.10} parent=31 // pred_check
        %p1619 = pneg %p1618
      $region38: #{up3d_forward.10} parent=31 // pred_check_branch
        %1621 = sbr.rel (%p1619) target = $region40
      $region39: #{up3d_forward.10} parent=31 // pred_region
        %v1622 = vld [vmem:[#allocation2] sm:$0xf]
        %1623 = vst.msk [vmem:[%s4] sm:$0xf] %vm1591, %v1622
        %v1624 = vld [vmem:[#allocation3] sm:$0xf]
        %1625 = vst.msk [vmem:[%s5] sm:$0xf] %vm1591, %v1624
      $region40: #{up3d_forward.10} parent=31 // pred_fallthru
        _
      %p1626 = scmp.lt.s32.totalorder %s17, 1
      %s1627 = scalar_select %p1626, %s17, 1
      %s1628 = smul.addr %s1627, 7
      %s1629 = smul.addr %s1628, 4
      %s1630 = scalar_lea.vmem %s3, %s1629
      // Predicated region
      $region41: #{up3d_forward.10} parent=31 // pred_check
        %p1631 = pneg %p103
      $region42: #{up3d_forward.10} parent=31 // pred_check_branch
        %1633 = sbr.rel (%p1631) target = $region44
      $region43: #{up3d_forward.10} parent=31 // pred_region
        _
      $region44: #{up3d_forward.10} parent=31 // pred_fallthru
        _
      // Predicated region
      $region45: #{up3d_forward.10} parent=31 // pred_check
        %p1634 = pneg %p124
      $region46: #{up3d_forward.10} parent=31 // pred_check_branch
        %1636 = sbr.rel (%p1634) target = $region48
      $region47: #{up3d_forward.10} parent=31 // pred_region
        _
      $region48: #{up3d_forward.10} parent=31 // pred_fallthru
        _
      // Predicated region
      $region49: #{up3d_forward.10} parent=31 // pred_check
        %p1637 = pneg %p145
      $region50: #{up3d_forward.10} parent=31 // pred_check_branch
        %1639 = sbr.rel (%p1637) target = $region52
      $region51: #{up3d_forward.10} parent=31 // pred_region
        _
      $region52: #{up3d_forward.10} parent=31 // pred_fallthru
        _
      // Predicated region
      $region53: #{up3d_forward.10} parent=31 // pred_check
        %p1640 = pneg %p124
      $region54: #{up3d_forward.10} parent=31 // pred_check_branch
        %1642 = sbr.rel (%p1640) target = $region56
      $region55: #{up3d_forward.10} parent=31 // pred_region
        _
      $region56: #{up3d_forward.10} parent=31 // pred_fallthru
        _
      // Predicated region
      $region57: #{up3d_forward.10} parent=31 // pred_check
        %p1643 = pneg %p145
      $region58: #{up3d_forward.10} parent=31 // pred_check_branch
        %1645 = sbr.rel (%p1643) target = $region60
      $region59: #{up3d_forward.10} parent=31 // pred_region
        _
      $region60: #{up3d_forward.10} parent=31 // pred_fallthru
        _
    $region32: #{up3d_forward.10} parent=5 // pred_fallthru
      _
    %p1646 = scmp.le.s32.totalorder 2, %s12
    // Predicated region
    $region61: #{up3d_forward.10} parent=5 // pred_check
      %p1647 = pneg %p1646
    $region62: #{up3d_forward.10} parent=5 // pred_check_branch
      %1649 = sbr.rel (%p1647) target = $region64
    $region63: #{up3d_forward.10} parent=5 // pred_region
      %s1650 = ssub.s32 %s12, 2
      // Predicated region
      $region65: #{up3d_forward.10} parent=63 // pred_check
        %p1651 = pneg %p109
      $region66: #{up3d_forward.10} parent=63 // pred_check_branch
        %1653 = sbr.rel (%p1651) target = $region68
      $region67: #{up3d_forward.10} parent=63 // pred_region
        %p1654 = scmp.lt.s32.totalorder %s18, 1
        %s1655 = scalar_select %p1654, %s18, 1
        %s1656 = smul.addr %s1655, 7
        %s1657 = smul.addr %s1656, 4
        %s1658 = scalar_lea.vmem %s3, %s1657
      $region68: #{up3d_forward.10} parent=63 // pred_fallthru
        _
    $region64: #{up3d_forward.10} parent=5 // pred_fallthru
      _
  $region6: #{up3d_forward.10} parent=0 // loop_footer
    %s16 = sadd.s32 1, %s12
  $region7: #{up3d_forward.10} parent=0 // loop_footer_branch
    %11 = sbr.rel target = $region3
  $region8: #{up3d_forward.10} parent=0 // loop_exit
    _

// kernel: up3d_forward.11
$region0: #{up3d_forward.11}
  #allocation0 [shape = 'u32[]', space=smem, size = 0x4, offset = 0x4, fixed_abs, tag = 'smem constant byte address 0x4 - core index']
  #allocation1 [shape = 'u32[72,128]{1,0:T(1,128)}', space=vmem, size = 0x9000, scoped, tag = 'internal scratch']
  %s0 = inlined_call_operand.vmem [shape: f32[2,4,512], index: 0, kind: input, shape index: {}]
  %s1 = inlined_call_operand.vmem [shape: f32[4,1], index: 1, kind: input, shape index: {}]
  %s2 = inlined_call_operand.vmem [shape: f32[4,1], index: 2, kind: input, shape index: {}]
  %s3 = inlined_call_operand.vmem [shape: f32[2,4,512], index: 3, kind: output, shape index: {}]
  %s4 = sld [smem:[#allocation0]]
  $region45: #{up3d_forward.11} parent=0
    _
  %s6 = ssub.s32 1, %s4
  %s7 = scalar_select 0, %s6, %s4
  loop: start=0, step=1, limit=4
  $region2: #{up3d_forward.11} parent=0 // loop_pre_header
    _
  $region3: #{up3d_forward.11} parent=0 // loop_header
    %s9 = sphi 0, %s13
    %p10 = scmp.ge.s32.totalorder %s9, 4
    %s16 = sphi 0, %s28
    %s17 = sphi 0, %s24
    %s18 = sphi 0, %s16
    %s19 = sphi 0, %s17
    %s20 = sphi 0, %s18
    %s21 = sphi 0, %s19
    %s33 = sphi 0, %s35
    %s36 = sphi 0, %s33
    %s37 = sphi 0, %s36
    %s53 = sphi 0, %s37
    %s57 = sphi 0, %s57
    %s59 = sphi 0, %s57
    %s60 = sphi 0, %s59
    %s74 = sphi 0, %s60
    %s78 = sphi 0, %s78
    %s80 = sphi 0, %s78
    %s81 = sphi 0, %s80
    %s95 = sphi 0, %s81
    %s103 = sphi 0, %s105
    %s106 = sphi 0, %s103
    %s107 = sphi 0, %s106
    %s123 = sphi 0, %s107
  $region4: #{up3d_forward.11} parent=0 // loop_header_branch
    %12 = sbr.rel (%p10) target = $region8
  $region5: #{up3d_forward.11} parent=0 // loop_body
    %s14 = ssub.s32 %s9, 1
    %s15 = ssub.s32 %s9, 2
    %s22 = sadd.s32 1, %s17
    %p23 = scmp.ge.s32.totalorder %s22, 1
    %s24 = scalar_select %p23, 0, %s22
    %s25 = sadd.s32 1, %s16
    %s26 = scalar_select %p23, %s25, %s16
    %p27 = scmp.ge.s32.totalorder %s26, 2
    %s28 = scalar_select %p27, 0, %s26
    %s29 = ssub.s32 %s16, %s28
    %s30 = ssub.s32 %s17, %s24
    %s31 = sor.u32 %s29, %s30
    %p32 = scmp.eq.s32.totalorder %s31, 0
    %s34 = sadd.s32 %s33, 1
    %s35 = scalar_select %p32, %s33, %s34
    %p38 = pneg %p32
    %p39 = scmp.eq.s32.totalorder %s9, 1
    %p40 = por %p38, %p39
    %p41 = scmp.ne.s32.totalorder %s33, %s36
    %p42 = scmp.eq.s32.totalorder %s9, 0
    %p43 = por %p41, %p42
    %p44 = scmp.ne.s32.totalorder %s33, %s36
    %p45 = scmp.eq.s32.totalorder %s14, 1
    %p46 = por %p44, %p45
    %p47 = scmp.ne.s32.totalorder %s36, %s37
    %p48 = scmp.eq.s32.totalorder %s14, 0
    %p49 = por %p47, %p48
    %p50 = scmp.ne.s32.totalorder %s36, %s37
    %p51 = scmp.eq.s32.totalorder %s15, 1
    %p52 = por %p50, %p51
    %p54 = scmp.ne.s32.totalorder %s37, %s53
    %p55 = scmp.eq.s32.totalorder %s15, 0
    %p56 = por %p54, %p55
    %s58 = sadd.s32 %s57, 1
    %p61 = scmp.eq.s32.totalorder %s9, 1
    %p62 = scmp.ne.s32.totalorder %s57, %s59
    %p63 = scmp.eq.s32.totalorder %s9, 0
    %p64 = por %p62, %p63
    %p65 = scmp.ne.s32.totalorder %s57, %s59
    %p66 = scmp.eq.s32.totalorder %s14, 1
    %p67 = por %p65, %p66
    %p68 = scmp.ne.s32.totalorder %s59, %s60
    %p69 = scmp.eq.s32.totalorder %s14, 0
    %p70 = por %p68, %p69
    %p71 = scmp.ne.s32.totalorder %s59, %s60
    %p72 = scmp.eq.s32.totalorder %s15, 1
    %p73 = por %p71, %p72
    %p75 = scmp.ne.s32.totalorder %s60, %s74
    %p76 = scmp.eq.s32.totalorder %s15, 0
    %p77 = por %p75, %p76
    %s79 = sadd.s32 %s78, 1
    %p82 = scmp.eq.s32.totalorder %s9, 1
    %p83 = scmp.ne.s32.totalorder %s78, %s80
    %p84 = scmp.eq.s32.totalorder %s9, 0
    %p85 = por %p83, %p84
    %p86 = scmp.ne.s32.totalorder %s78, %s80
    %p87 = scmp.eq.s32.totalorder %s14, 1
    %p88 = por %p86, %p87
    %p89 = scmp.ne.s32.totalorder %s80, %s81
    %p90 = scmp.eq.s32.totalorder %s14, 0
    %p91 = por %p89, %p90
    %p92 = scmp.ne.s32.totalorder %s80, %s81
    %p93 = scmp.eq.s32.totalorder %s15, 1
    %p94 = por %p92, %p93
    %p96 = scmp.ne.s32.totalorder %s81, %s95
    %p97 = scmp.eq.s32.totalorder %s15, 0
    %p98 = por %p96, %p97
    %s99 = ssub.s32 %s16, %s28
    %s100 = ssub.s32 %s17, %s24
    %s101 = sor.u32 %s99, %s100
    %p102 = scmp.eq.s32.totalorder %s101, 0
    %s104 = sadd.s32 %s103, 1
    %s105 = scalar_select %p102, %s103, %s104
    %p108 = pneg %p102
    %p109 = scmp.eq.s32.totalorder %s9, 1
    %p110 = por %p108, %p109
    %p111 = scmp.ne.s32.totalorder %s103, %s106
    %p112 = scmp.eq.s32.totalorder %s9, 0
    %p113 = por %p111, %p112
    %p114 = scmp.ne.s32.totalorder %s103, %s106
    %p115 = scmp.eq.s32.totalorder %s14, 1
    %p116 = por %p114, %p115
    %p117 = scmp.ne.s32.totalorder %s106, %s107
    %p118 = scmp.eq.s32.totalorder %s14, 0
    %p119 = por %p117, %p118
    %p120 = scmp.ne.s32.totalorder %s106, %s107
    %p121 = scmp.eq.s32.totalorder %s15, 1
    %p122 = por %p120, %p121
    %p124 = scmp.ne.s32.totalorder %s107, %s123
    %p125 = scmp.eq.s32.totalorder %s15, 0
    %p126 = por %p124, %p125
    %p127 = scmp.le.s32.totalorder 1, %s9
    %p128 = scmp.lt.s32.totalorder %s9, 3
    %p129 = pnand %p127, %p128
    %p130 = pneg %p129
    // Predicated region
    $region9: #{up3d_forward.11} parent=5 // pred_check
      _
    $region10: #{up3d_forward.11} parent=5 // pred_check_branch
      %132 = sbr.rel (%p129) target = $region12
    $region11: #{up3d_forward.11} parent=5 // pred_region
      %s133 = ssub.s32 %s9, 1
      // Predicated region
      $region13: #{up3d_forward.11} parent=11 // pred_check
        %p134 = pneg %p70
      $region14: #{up3d_forward.11} parent=11 // pred_check_branch
        %136 = sbr.rel (%p134) target = $region16
      $region15: #{up3d_forward.11} parent=11 // pred_region
        _
      $region16: #{up3d_forward.11} parent=11 // pred_fallthru
        _
      // Predicated region
      $region17: #{up3d_forward.11} parent=11 // pred_check
        %p137 = pneg %p91
      $region18: #{up3d_forward.11} parent=11 // pred_check_branch
        %139 = sbr.rel (%p137) target = $region20
      $region19: #{up3d_forward.11} parent=11 // pred_region
        _
      $region20: #{up3d_forward.11} parent=11 // pred_fallthru
        _
    $region12: #{up3d_forward.11} parent=5 // pred_fallthru
      _
    %p140 = scmp.lt.s32.totalorder %s9, 2
    // Predicated region
    $region21: #{up3d_forward.11} parent=5 // pred_check
      %p141 = pneg %p140
    $region22: #{up3d_forward.11} parent=5 // pred_check_branch
      %143 = sbr.rel (%p141) target = $region24
    $region23: #{up3d_forward.11} parent=5 // pred_region
      // Predicated region
      $region25: #{up3d_forward.11} parent=23 // pred_check
        %p144 = pneg %p43
      $region26: #{up3d_forward.11} parent=23 // pred_check_branch
        %146 = sbr.rel (%p144) target = $region28
      $region27: #{up3d_forward.11} parent=23 // pred_region
        %s147 = smul.u32 4, %s17
        %p148 = scmp.lt.s32.totalorder %s16, 1
        %s149 = scalar_select %p148, %s16, 1
        %p150 = scmp.lt.s32.totalorder %s147, 3
        %s151 = scalar_select %p150, %s147, 3
        %s152 = smul.addr %s149, 4
        %s153 = sadd.s32 %s151, %s152
        %s154 = smul.addr %s153, 4
        %s155 = scalar_lea.vmem %s0, %s154
        %s156 = smul.u32 4, %s17
      $region28: #{up3d_forward.11} parent=23 // pred_fallthru
        _
    $region24: #{up3d_forward.11} parent=5 // pred_fallthru
      _
    %p157 = scmp.le.s32.totalorder 1, %s9
    %p158 = scmp.lt.s32.totalorder %s9, 3
    %p159 = pnand %p157, %p158
    %p160 = pneg %p159
    // Predicated region
    $region29: #{up3d_forward.11} parent=5 // pred_check
      _
    $region30: #{up3d_forward.11} parent=5 // pred_check_branch
      %162 = sbr.rel (%p159) target = $region32
    $region31: #{up3d_forward.11} parent=5 // pred_region
      %s163 = ssub.s32 %s9, 1
      %s164 = smul.u32 4, %s19
      %p165 = scmp.lt.s32.totalorder %s18, 1
      %s166 = scalar_select %p165, %s18, 1
      %p167 = scmp.lt.s32.totalorder %s164, 3
      %s168 = scalar_select %p167, %s164, 3
      %s169 = smul.addr %s166, 4
      %s170 = sadd.s32 %s168, %s169
      %s171 = smul.addr %s170, 4
      %s172 = scalar_lea.vmem %s0, %s171
      %p173 = pneg %p49
      %p174 = pneg %p46
      %p175 = pneg %p70
      %p176 = pneg %p67
      %p177 = pneg %p91
      %p178 = pneg %p88
      %p179 = pneg %p119
      %p180 = pneg %p116
      %s181 = smul.u32 4, %s19
      %p182 = scmp.lt.s32.totalorder %s18, 1
      %s183 = scalar_select %p182, %s18, 1
      %p184 = scmp.lt.s32.totalorder %s181, 3
      %s185 = scalar_select %p184, %s181, 3
      %s186 = smul.addr %s183, 4
      %s187 = sadd.s32 %s185, %s186
      %s188 = smul.addr %s187, 4
      %s189 = scalar_lea.vmem %s3, %s188
      %s190 = smul.u32 4, %s19
      %p191 = scmp.lt.s32.totalorder %s18, 1
      %s192 = scalar_select %p191, %s18, 1
      %p193 = scmp.lt.s32.totalorder %s190, 3
      %s194 = scalar_select %p193, %s190, 3
      %s195 = smul.addr %s192, 4
      %s196 = sadd.s32 %s194, %s195
      %s197 = smul.addr %s196, 4
      %s198 = scalar_lea.vmem %s0, %s197
      %s199 = smul.u32 4, %s19
      %s200 = smul.u32 4, %s19
      %p201 = scmp.lt.s32.totalorder %s18, 1
      %s202 = scalar_select %p201, %s18, 1
      %p203 = scmp.lt.s32.totalorder %s200, 3
      %s204 = scalar_select %p203, %s200, 3
      %s205 = smul.addr %s202, 4
      %s206 = sadd.s32 %s204, %s205
      %s207 = smul.addr %s206, 4
      %s208 = scalar_lea.vmem %s3, %s207
      %s209 = smul.u32 4, %s19
      %v210 = vld [vmem:[%s198] sm:$0xff]
      %v211 = vld [vmem:[%s198 + $0x8] sm:$0xff]
      %v212 = vld [vmem:[%s1] sm:$0xf]
      %214 = vset.pattern.permute.xlu0 0
      %215 = vperm.xlu0 %214, %v212
      %v216 = vpop.permute.xlu0 %215
      %v218 = vunpack.c.l.s4 839922192
      %v219 = vunpack.c.0.s8 %v218
      %v220 = vperm.slane %v216, %v219
      %v222 = vmul.f32 %v210, %v220
      %v223 = vmul.f32 %v211, %v220
      %v224 = vld [vmem:[%s2] sm:$0xf]
      %226 = vset.pattern.permute.xlu0 0
      %227 = vperm.xlu0 %226, %v224
      %v228 = vpop.permute.xlu0 %227
      %v230 = vunpack.c.l.s4 839922192
      %v231 = vunpack.c.0.s8 %v230
      %v232 = vperm.slane %v228, %v231
      %v234 = vadd.f32 %v222, %v232
      %v235 = vadd.f32 %v223, %v232
      %v236 = vxor.u32 %v234, 2147483648
      %v237 = vxor.u32 %v235, 2147483648
      %v238 = vmul.f32 %v236, 1.442695
      %v239 = vpow.pop %v238
      %v240 = vmul.f32 %v237, 1.442695
      %v241 = vpow.pop %v240
      %v242 = vadd.f32 %v239, 1.0
      %v243 = vadd.f32 %v241, 1.0
      %v244 = vrcp.pop %v242
      %v245 = vmul.f32 %v242, %v244
      %v246 = vsub.f32 1.0, %v245
      %v247 = vmul.f32 %v244, %v246
      %v248 = vadd.f32 %v244, %v247
      %vm249 = vweird.f32 %v242
      %vm250 = vweird.f32 %v244
      %vm251 = vmor %vm249, %vm250
      %v252 = vsel %vm251, %v244, %v248
      %v253 = vand.u32 2147483647, %v242
      %vm254 = vcmp.eq.f32.partialorder %v253, 8.507059e+37
      %v255 = vand.u32 %v242, 2147483648
      %v256 = vor.u32 1.1754944e-38, %v255
      %v257 = vsel %vm254, %v256, %v252
      %v258 = vmul.f32 1.0, %v257
      %v259 = vrcp.pop %v243
      %v260 = vmul.f32 %v243, %v259
      %v261 = vsub.f32 1.0, %v260
      %v262 = vmul.f32 %v259, %v261
      %v263 = vadd.f32 %v259, %v262
      %vm264 = vweird.f32 %v243
      %vm265 = vweird.f32 %v259
      %vm266 = vmor %vm264, %vm265
      %v267 = vsel %vm266, %v259, %v263
      %v268 = vand.u32 2147483647, %v243
      %vm269 = vcmp.eq.f32.partialorder %v268, 8.507059e+37
      %v270 = vand.u32 %v243, 2147483648
      %v271 = vor.u32 1.1754944e-38, %v270
      %v272 = vsel %vm269, %v271, %v267
      %v273 = vmul.f32 1.0, %v272
      %v274 = vmul.f32 %v234, %v258
      %v275 = vmul.f32 %v235, %v273
      %276 = vst [vmem:[%s208] sm:$0xff] %v274
      %277 = vst [vmem:[%s208 + $0x8] sm:$0xff] %v275
      %s278 = smul.u32 4, %s19
      %p279 = scmp.lt.s32.totalorder %s18, 1
      %s280 = scalar_select %p279, %s18, 1
      %p281 = scmp.lt.s32.totalorder %s278, 3
      %s282 = scalar_select %p281, %s278, 3
      %s283 = smul.addr %s280, 4
      %s284 = sadd.s32 %s282, %s283
      %s285 = smul.addr %s284, 4
      %s286 = scalar_lea.vmem %s3, %s285
      // Predicated region
      $region33: #{up3d_forward.11} parent=31 // pred_check
        %p287 = pneg %p116
      $region34: #{up3d_forward.11} parent=31 // pred_check_branch
        %289 = sbr.rel (%p287) target = $region36
      $region35: #{up3d_forward.11} parent=31 // pred_region
        %s290 = smul.u32 4, %s19
      $region36: #{up3d_forward.11} parent=31 // pred_fallthru
        _
    $region32: #{up3d_forward.11} parent=5 // pred_fallthru
      _
    %p291 = scmp.le.s32.totalorder 2, %s9
    // Predicated region
    $region37: #{up3d_forward.11} parent=5 // pred_check
      %p292 = pneg %p291
    $region38: #{up3d_forward.11} parent=5 // pred_check_branch
      %294 = sbr.rel (%p292) target = $region40
    $region39: #{up3d_forward.11} parent=5 // pred_region
      %s295 = ssub.s32 %s9, 2
      // Predicated region
      $region41: #{up3d_forward.11} parent=39 // pred_check
        %p296 = pneg %p122
      $region42: #{up3d_forward.11} parent=39 // pred_check_branch
        %298 = sbr.rel (%p296) target = $region44
      $region43: #{up3d_forward.11} parent=39 // pred_region
        %s299 = smul.u32 4, %s21
        %p300 = scmp.lt.s32.totalorder %s20, 1
        %s301 = scalar_select %p300, %s20, 1
        %p302 = scmp.lt.s32.totalorder %s299, 3
        %s303 = scalar_select %p302, %s299, 3
        %s304 = smul.addr %s301, 4
        %s305 = sadd.s32 %s303, %s304
        %s306 = smul.addr %s305, 4
        %s307 = scalar_lea.vmem %s3, %s306
      $region44: #{up3d_forward.11} parent=39 // pred_fallthru
        _
    $region40: #{up3d_forward.11} parent=5 // pred_fallthru
      _
  $region6: #{up3d_forward.11} parent=0 // loop_footer
    %s13 = sadd.s32 1, %s9
  $region7: #{up3d_forward.11} parent=0 // loop_footer_branch
    %8 = sbr.rel target = $region3
  $region8: #{up3d_forward.11} parent=0 // loop_exit
    _

</llo_original>
